<compile_context>
chip_gen: v6e
topology: v6e:2x2x1
jax: 0.10.0
libtpu: 0.0.40
codegen_flags: <defaults>
</compile_context>

<pallas_src>
import numpy as np
import jax
import jax.numpy as jnp
from jax.experimental import pallas as pl
from jax.experimental.pallas import tpu as pltpu

HIDDEN = 32
NUM_LAYERS = 2   # => Linear(in,H), ReLU, Linear(H,H), ReLU, Linear(H,out), LayerNorm
LN_EPS = 1e-5


def _round_up(x, m):
    return (x + m - 1) // m * m


# ---------------------------------------------------------------------------
# Fused kernel: both MLP+LayerNorm chains as one block-structured chain
# ---------------------------------------------------------------------------
def encoder_kernel(node_ref, edge_ref, w_ref, b_ref, out_ref, h1_scr):
    """Rows 0:N of out_ref = node_mlp(node), rows N:N+E = edge_mlp(edge)."""
    N, Dn = node_ref.shape
    E, De = edge_ref.shape
    H = out_ref.shape[1]
    H2 = 2 * H
    f32 = jnp.float32

    # Static row offsets inside the packed weight slab (free views).
    o1 = _round_up(Dn, 8)            # start of edge layer-1 block
    o2 = o1 + _round_up(De, 8)       # start of block-diagonal W2
    o3 = o2 + H2                     # start of stacked W3

    b1 = b_ref[0:1, :]               # (1, 2H) = [node_b1 | edge_b1]
    b2 = b_ref[1:2, :]               # (1, 2H) = [node_b2 | edge_b2]

    # ---- layer 1 (per-domain; each result lands in its own lane half) ----
    h1n = jnp.maximum(
        jnp.dot(node_ref[...], w_ref[0:Dn, :], preferred_element_type=f32) + b1, 0.0)
    h1e = jnp.maximum(
        jnp.dot(edge_ref[...], w_ref[o1:o1 + De, :], preferred_element_type=f32) + b1, 0.0)
    h1_scr[0:N, :] = h1n             # node rows: valid data in lanes 0:H
    h1_scr[N:N + E, :] = h1e         # edge rows: valid data in lanes H:2H
    h1 = h1_scr[...]                 # [N+E, 2H]

    # ---- layer 2 (block-diagonal W2: halves never mix) ----
    h2 = jnp.maximum(
        jnp.dot(h1, w_ref[o2:o2 + H2, :], preferred_element_type=f32) + b2, 0.0)

    # Zero each row's "other" half so the stacked layer-3 matmul stays exact.
    row2 = jax.lax.broadcasted_iota(jnp.int32, (N + E, H2), 0)
    col2 = jax.lax.broadcasted_iota(jnp.int32, (N + E, H2), 1)
    h2 = jnp.where((row2 < N) == (col2 < H), h2, 0.0)

    # ---- layer 3 (stacked [node_w3; edge_w3] -> directly [N+E, H]) ----
    is_node = jax.lax.broadcasted_iota(jnp.int32, (N + E, H), 0) < N
    b3 = jnp.where(is_node, b_ref[2:3, 0:H], b_ref[3:4, 0:H])
    y = jnp.dot(h2, w_ref[o3:o3 + H2, 0:H], preferred_element_type=f32) + b3

    # ---- LayerNorm over H lanes, per-domain gamma/beta ----
    gamma = jnp.where(is_node, b_ref[4:5, 0:H], b_ref[5:6, 0:H])
    beta = jnp.where(is_node, b_ref[6:7, 0:H], b_ref[7:8, 0:H])
    mu = jnp.mean(y, axis=-1, keepdims=True)
    var = jnp.mean((y - mu) ** 2, axis=-1, keepdims=True)
    s = gamma * jax.lax.rsqrt(var + LN_EPS)
    out_ref[...] = y * s + (beta - mu * s)


# ---------------------------------------------------------------------------
# One-time parameter packing into two 8-sublane-aligned slabs
# ---------------------------------------------------------------------------
def pack_encoder_params(params):
    nw1, nb1, nw2, nb2, nw3, nb3, ng, nbe = params['node']
    ew1, eb1, ew2, eb2, ew3, eb3, eg, ebe = params['edge']
    H = nw2.shape[0]
    Dn, De = nw1.shape[0], ew1.shape[0]
    f32 = jnp.float32
    z = lambda r, c: jnp.zeros((r, c), f32)

    def pad_rows(a):
        p = (-a.shape[0]) % 8
        return a if p == 0 else jnp.concatenate([a, z(p, a.shape[1])], axis=0)

    w1n = pad_rows(jnp.concatenate([nw1, z(Dn, H)], axis=1))      # node w1 -> lanes 0:H
    w1e = pad_rows(jnp.concatenate([z(De, H), ew1], axis=1))      # edge w1 -> lanes H:2H
    w2b = jnp.concatenate(                                        # block-diagonal W2
        [jnp.concatenate([nw2, z(H, H)], axis=1),
         jnp.concatenate([z(H, H), ew2], axis=1)], axis=0)
    w3s = jnp.concatenate(                                        # stacked W3 in lanes 0:H
        [jnp.concatenate([nw3, z(H, H)], axis=1),
         jnp.concatenate([ew3, z(H, H)], axis=1)], axis=0)
    w_slab = jnp.concatenate([w1n, w1e, w2b, w3s], axis=0)        # [Dn8+De8+4H, 2H]

    half = lambda a: jnp.concatenate([a.reshape(1, H), z(1, H)], axis=1)
    b_slab = jnp.concatenate(
        [jnp.concatenate([nb1.reshape(1, H), eb1.reshape(1, H)], axis=1),
         jnp.concatenate([nb2.reshape(1, H), eb2.reshape(1, H)], axis=1),
         half(nb3), half(eb3), half(ng), half(eg), half(nbe), half(ebe)],
        axis=0)                                                   # [8, 2H]
    return w_slab, b_slab


# ---------------------------------------------------------------------------
# Wrapper
# ---------------------------------------------------------------------------
def encoder_forward(packed, node_features, edge_features):
    w_slab, b_slab = packed
    N, Dn = node_features.shape
    E, De = edge_features.shape
    H = b_slab.shape[1] // 2
    f32 = jnp.float32

    flops = 2 * (N * Dn * 2 * H + E * De * 2 * H
                 + (N + E) * 2 * H * 2 * H + (N + E) * 2 * H * H)
    bytes_accessed = 4 * (N * Dn + E * De + int(w_slab.size) + int(b_slab.size)
                          + (N + E) * H)

    vmem = pl.BlockSpec(memory_space=pltpu.MemorySpace.VMEM)
    out = pl.pallas_call(
        encoder_kernel,
        out_shape=jax.ShapeDtypeStruct((N + E, H), f32),
        in_specs=[vmem, vmem, vmem, vmem],
        out_specs=vmem,
        scratch_shapes=[pltpu.VMEM((N + E, 2 * H), f32)],
        cost_estimate=pl.CostEstimate(flops=flops,
                                      transcendentals=N + E,
                                      bytes_accessed=bytes_accessed),
    )(node_features, edge_features, w_slab, b_slab)
    return out[:N], out[N:]


# ---------------------------------------------------------------------------
# Deterministic parameter init (PyTorch-like uniform fan-in bound)
# ---------------------------------------------------------------------------
def init_linear(key, din, dout):
    kw, kb = jax.random.split(key)
    bound = 1.0 / np.sqrt(din)
    w = jax.random.uniform(kw, (din, dout), jnp.float32, -bound, bound)
    b = jax.random.uniform(kb, (1, dout), jnp.float32, -bound, bound)
    return w, b


def init_mlp(key, din, hidden, dout):
    k1, k2, k3 = jax.random.split(key, 3)
    w1, b1 = init_linear(k1, din, hidden)
    w2, b2 = init_linear(k2, hidden, hidden)
    w3, b3 = init_linear(k3, hidden, dout)
    gamma = jnp.ones((1, dout), jnp.float32)
    beta = jnp.zeros((1, dout), jnp.float32)
    return [w1, b1, w2, b2, w3, b3, gamma, beta]


def init_encoder(key, din_node, din_edge, hidden):
    kn, ke = jax.random.split(key)
    return {'node': init_mlp(kn, din_node, hidden, hidden),
            'edge': init_mlp(ke, din_edge, hidden, hidden)}


# ---------------------------------------------------------------------------
# Pure-JAX reference for a numerical sanity check
# ---------------------------------------------------------------------------
def encoder_ref(params, nf, ef):
    def mlp(x, p):
        w1, b1, w2, b2, w3, b3, g, be = p
        h = jax.nn.relu(x @ w1 + b1)
        h = jax.nn.relu(h @ w2 + b2)
        y = h @ w3 + b3
        mu = y.mean(-1, keepdims=True)
        var = ((y - mu) ** 2).mean(-1, keepdims=True)
        return (y - mu) / jnp.sqrt(var + LN_EPS) * g + be
    return mlp(nf, params['node']), mlp(ef, params['edge'])


# ---------------------------------------------------------------------------
if __name__ == "__main__":
    key = jax.random.PRNGKey(0)
    kp, kn, ke = jax.random.split(key, 3)

    N, E = 64, 128                 # nodes / edges
    DIN_NODE, DIN_EDGE = 8, 8      # input feature dims

    params = init_encoder(kp, DIN_NODE, DIN_EDGE, HIDDEN)
    packed = pack_encoder_params(params)          # one-time packing
    node_features = jax.random.normal(kn, (N, DIN_NODE), jnp.float32)
    edge_features = jax.random.normal(ke, (E, DIN_EDGE), jnp.float32)

    fwd = jax.jit(encoder_forward)
    node_lat, edge_lat = fwd(packed, node_features, edge_features)
    node_lat, edge_lat = jax.block_until_ready((node_lat, edge_lat))

    assert node_lat.shape == (N, HIDDEN) and node_lat.dtype == jnp.float32
    assert edge_lat.shape == (E, HIDDEN) and edge_lat.dtype == jnp.float32

    ref_n, ref_e = encoder_ref(params, node_features, edge_features)
    np.testing.assert_allclose(np.asarray(node_lat), np.asarray(ref_n),
                               rtol=1e-4, atol=1e-4)
    np.testing.assert_allclose(np.asarray(edge_lat), np.asarray(ref_e),
                               rtol=1e-4, atol=1e-4)

    print("KERNEL_OK")
</pallas_src>

<mosaic_0001>
module attributes {stable_mosaic.version = 11 : i64} {
  func.func @encoder_kernel(%arg0: memref<64x8xf32, #tpu.memory_space<vmem>>, %arg1: memref<128x8xf32, #tpu.memory_space<vmem>>, %arg2: memref<144x64xf32, #tpu.memory_space<vmem>>, %arg3: memref<8x64xf32, #tpu.memory_space<vmem>>, %arg4: memref<192x32xf32, #tpu.memory_space<vmem>>, %arg5: memref<192x64xf32, #tpu.memory_space<vmem>>) attributes {dimension_semantics = [], scalar_prefetch = 0 : i64, scratch_operands = 1 : i64, tpu.core_type = #tpu.core_type<tc>} {
    %c0 = arith.constant 0 : index
    %c0_0 = arith.constant 0 : index
    %0 = vector.load %arg3[%c0, %c0_0] : memref<8x64xf32, #tpu.memory_space<vmem>>, vector<1x64xf32>
    %c1 = arith.constant 1 : index
    %c0_1 = arith.constant 0 : index
    %1 = vector.load %arg3[%c1, %c0_1] : memref<8x64xf32, #tpu.memory_space<vmem>>, vector<1x64xf32>
    %c0_2 = arith.constant 0 : index
    %c0_3 = arith.constant 0 : index
    %2 = vector.load %arg0[%c0_2, %c0_3] : memref<64x8xf32, #tpu.memory_space<vmem>>, vector<64x8xf32>
    %c0_4 = arith.constant 0 : index
    %c0_5 = arith.constant 0 : index
    %3 = vector.load %arg2[%c0_4, %c0_5] : memref<144x64xf32, #tpu.memory_space<vmem>>, vector<8x64xf32>
    %cst = arith.constant dense<0.000000e+00> : vector<64x64xf32>
    %4 = tpu.matmul %2, %3, %cst {dimension_numbers = #tpu.dot_dimension_numbers<[1], [0], [0], [1], [0, 0, 1, 1], [], []>} : vector<64x8xf32>, vector<8x64xf32>, vector<64x64xf32> -> vector<64x64xf32>
    %5 = vector.broadcast %0 : vector<1x64xf32> to vector<64x64xf32>
    %6 = arith.addf %4, %5 : vector<64x64xf32>
    %cst_6 = arith.constant 0.000000e+00 : f32
    %7 = vector.broadcast %cst_6 : f32 to vector<64x64xf32>
    %8 = arith.maximumf %6, %7 : vector<64x64xf32>
    %c0_7 = arith.constant 0 : index
    %c0_8 = arith.constant 0 : index
    %9 = vector.load %arg1[%c0_7, %c0_8] : memref<128x8xf32, #tpu.memory_space<vmem>>, vector<128x8xf32>
    %c8 = arith.constant 8 : index
    %c0_9 = arith.constant 0 : index
    %10 = vector.load %arg2[%c8, %c0_9] : memref<144x64xf32, #tpu.memory_space<vmem>>, vector<8x64xf32>
    %cst_10 = arith.constant dense<0.000000e+00> : vector<128x64xf32>
    %11 = tpu.matmul %9, %10, %cst_10 {dimension_numbers = #tpu.dot_dimension_numbers<[1], [0], [0], [1], [0, 0, 1, 1], [], []>} : vector<128x8xf32>, vector<8x64xf32>, vector<128x64xf32> -> vector<128x64xf32>
    %12 = vector.broadcast %0 : vector<1x64xf32> to vector<128x64xf32>
    %13 = arith.addf %11, %12 : vector<128x64xf32>
    %cst_11 = arith.constant 0.000000e+00 : f32
    %14 = vector.broadcast %cst_11 : f32 to vector<128x64xf32>
    %15 = arith.maximumf %13, %14 : vector<128x64xf32>
    %c0_12 = arith.constant 0 : index
    %c0_13 = arith.constant 0 : index
    %16 = vector.load %arg5[%c0_12, %c0_13] : memref<192x64xf32, #tpu.memory_space<vmem>>, vector<64x64xf32>
    tpu.vector_store %arg5[%c0_12, %c0_13], %8 {strides = array<i32>} : memref<192x64xf32, #tpu.memory_space<vmem>>, vector<64x64xf32>,
    %c64 = arith.constant 64 : index
    %c0_14 = arith.constant 0 : index
    %17 = vector.load %arg5[%c64, %c0_14] : memref<192x64xf32, #tpu.memory_space<vmem>>, vector<128x64xf32>
    tpu.vector_store %arg5[%c64, %c0_14], %15 {strides = array<i32>} : memref<192x64xf32, #tpu.memory_space<vmem>>, vector<128x64xf32>,
    %c0_15 = arith.constant 0 : index
    %c0_16 = arith.constant 0 : index
    %18 = vector.load %arg5[%c0_15, %c0_16] : memref<192x64xf32, #tpu.memory_space<vmem>>, vector<192x64xf32>
    %c16 = arith.constant 16 : index
    %c0_17 = arith.constant 0 : index
    %19 = vector.load %arg2[%c16, %c0_17] : memref<144x64xf32, #tpu.memory_space<vmem>>, vector<64x64xf32>
    %cst_18 = arith.constant dense<0.000000e+00> : vector<192x64xf32>
    %20 = tpu.matmul %18, %19, %cst_18 {dimension_numbers = #tpu.dot_dimension_numbers<[1], [0], [0], [1], [0, 0, 1, 1], [], []>} : vector<192x64xf32>, vector<64x64xf32>, vector<192x64xf32> -> vector<192x64xf32>
    %21 = vector.broadcast %1 : vector<1x64xf32> to vector<192x64xf32>
    %22 = arith.addf %20, %21 : vector<192x64xf32>
    %cst_19 = arith.constant 0.000000e+00 : f32
    %23 = vector.broadcast %cst_19 : f32 to vector<192x64xf32>
    %24 = arith.maximumf %22, %23 : vector<192x64xf32>
    %25 = tpu.iota {dimensions = array<i32: 0>} : vector<192x64xi32>
    %26 = tpu.iota {dimensions = array<i32: 1>} : vector<192x64xi32>
    %c64_i32 = arith.constant 64 : i32
    %27 = vector.broadcast %c64_i32 : i32 to vector<192x64xi32>
    %28 = arith.cmpi slt, %25, %27 : vector<192x64xi32>
    %c32_i32 = arith.constant 32 : i32
    %29 = vector.broadcast %c32_i32 : i32 to vector<192x64xi32>
    %30 = arith.cmpi slt, %26, %29 : vector<192x64xi32>
    %31 = arith.xori %28, %30 : vector<192x64xi1>
    %cst_20 = arith.constant dense<true> : vector<192x64xi1>
    %32 = arith.xori %31, %cst_20 : vector<192x64xi1>
    %cst_21 = arith.constant 0.000000e+00 : f32
    %33 = vector.broadcast %cst_21 : f32 to vector<192x64xf32>
    %34 = arith.select %32, %24, %33 : vector<192x64xi1>, vector<192x64xf32>
    %35 = tpu.iota {dimensions = array<i32: 0>} : vector<192x32xi32>
    %c64_i32_22 = arith.constant 64 : i32
    %36 = vector.broadcast %c64_i32_22 : i32 to vector<192x32xi32>
    %37 = arith.cmpi slt, %35, %36 : vector<192x32xi32>
    %c2 = arith.constant 2 : index
    %c0_23 = arith.constant 0 : index
    %38 = vector.load %arg3[%c2, %c0_23] : memref<8x64xf32, #tpu.memory_space<vmem>>, vector<1x32xf32>
    %c3 = arith.constant 3 : index
    %c0_24 = arith.constant 0 : index
    %39 = vector.load %arg3[%c3, %c0_24] : memref<8x64xf32, #tpu.memory_space<vmem>>, vector<1x32xf32>
    %40 = vector.shape_cast %38 : vector<1x32xf32> to vector<1x32xf32>
    %41 = vector.broadcast %40 : vector<1x32xf32> to vector<192x32xf32>
    %42 = vector.shape_cast %39 : vector<1x32xf32> to vector<1x32xf32>
    %43 = vector.broadcast %42 : vector<1x32xf32> to vector<192x32xf32>
    %44 = arith.select %37, %41, %43 : vector<192x32xi1>, vector<192x32xf32>
    %c80 = arith.constant 80 : index
    %c0_25 = arith.constant 0 : index
    %45 = vector.load %arg2[%c80, %c0_25] : memref<144x64xf32, #tpu.memory_space<vmem>>, vector<64x32xf32>
    %cst_26 = arith.constant dense<0.000000e+00> : vector<192x32xf32>
    %46 = tpu.matmul %34, %45, %cst_26 {dimension_numbers = #tpu.dot_dimension_numbers<[1], [0], [0], [1], [0, 0, 1, 1], [], []>} : vector<192x64xf32>, vector<64x32xf32>, vector<192x32xf32> -> vector<192x32xf32>
    %47 = arith.addf %46, %44 : vector<192x32xf32>
    %c4 = arith.constant 4 : index
    %c0_27 = arith.constant 0 : index
    %48 = vector.load %arg3[%c4, %c0_27] : memref<8x64xf32, #tpu.memory_space<vmem>>, vector<1x32xf32>
    %c5 = arith.constant 5 : index
    %c0_28 = arith.constant 0 : index
    %49 = vector.load %arg3[%c5, %c0_28] : memref<8x64xf32, #tpu.memory_space<vmem>>, vector<1x32xf32>
    %50 = vector.shape_cast %48 : vector<1x32xf32> to vector<1x32xf32>
    %51 = vector.broadcast %50 : vector<1x32xf32> to vector<192x32xf32>
    %52 = vector.shape_cast %49 : vector<1x32xf32> to vector<1x32xf32>
    %53 = vector.broadcast %52 : vector<1x32xf32> to vector<192x32xf32>
    %54 = arith.select %37, %51, %53 : vector<192x32xi1>, vector<192x32xf32>
    %c6 = arith.constant 6 : index
    %c0_29 = arith.constant 0 : index
    %55 = vector.load %arg3[%c6, %c0_29] : memref<8x64xf32, #tpu.memory_space<vmem>>, vector<1x32xf32>
    %c7 = arith.constant 7 : index
    %c0_30 = arith.constant 0 : index
    %56 = vector.load %arg3[%c7, %c0_30] : memref<8x64xf32, #tpu.memory_space<vmem>>, vector<1x32xf32>
    %57 = vector.shape_cast %55 : vector<1x32xf32> to vector<1x32xf32>
    %58 = vector.broadcast %57 : vector<1x32xf32> to vector<192x32xf32>
    %59 = vector.shape_cast %56 : vector<1x32xf32> to vector<1x32xf32>
    %60 = vector.broadcast %59 : vector<1x32xf32> to vector<192x32xf32>
    %61 = arith.select %37, %58, %60 : vector<192x32xi1>, vector<192x32xf32>
    %cst_31 = arith.constant dense<0.000000e+00> : vector<192xf32>
    %62 = vector.multi_reduction <add>, %47, %cst_31 [1] : vector<192x32xf32> to vector<192xf32>
    %63 = vector.shape_cast %62 : vector<192xf32> to vector<192x1xf32>
    %cst_32 = arith.constant 3.200000e+01 : f32
    %64 = vector.broadcast %cst_32 : f32 to vector<192x1xf32>
    %65 = arith.divf %63, %64 : vector<192x1xf32>
    %66 = vector.broadcast %65 : vector<192x1xf32> to vector<192x32xf32>
    %67 = arith.subf %47, %66 : vector<192x32xf32>
    %68 = arith.mulf %67, %67 : vector<192x32xf32>
    %cst_33 = arith.constant dense<0.000000e+00> : vector<192xf32>
    %69 = vector.multi_reduction <add>, %68, %cst_33 [1] : vector<192x32xf32> to vector<192xf32>
    %70 = vector.shape_cast %69 : vector<192xf32> to vector<192x1xf32>
    %cst_34 = arith.constant 3.200000e+01 : f32
    %71 = vector.broadcast %cst_34 : f32 to vector<192x1xf32>
    %72 = arith.divf %70, %71 : vector<192x1xf32>
    %cst_35 = arith.constant 9.99999974E-6 : f32
    %73 = vector.broadcast %cst_35 : f32 to vector<192x1xf32>
    %74 = arith.addf %72, %73 : vector<192x1xf32>
    %75 = math.rsqrt %74 : vector<192x1xf32>
    %76 = vector.broadcast %75 : vector<192x1xf32> to vector<192x32xf32>
    %77 = arith.mulf %54, %76 : vector<192x32xf32>
    %78 = arith.mulf %47, %77 : vector<192x32xf32>
    %79 = vector.broadcast %65 : vector<192x1xf32> to vector<192x32xf32>
    %80 = arith.mulf %79, %77 : vector<192x32xf32>
    %81 = arith.subf %61, %80 : vector<192x32xf32>
    %82 = arith.addf %78, %81 : vector<192x32xf32>
    %c0_36 = arith.constant 0 : index
    %c0_37 = arith.constant 0 : index
    %83 = vector.load %arg4[%c0_36, %c0_37] : memref<192x32xf32, #tpu.memory_space<vmem>>, vector<192x32xf32>
    tpu.vector_store %arg4[%c0_36, %c0_37], %82 {strides = array<i32>} : memref<192x32xf32, #tpu.memory_space<vmem>>, vector<192x32xf32>,
    return
  }
}

</mosaic_0001>

<llo_original>
// kernel: encoder_forward.1
$region0: #{encoder_forward.1}
  #allocation0 [shape = 'u32[]', space=smem, size = 0x4, offset = 0x4, fixed_abs, tag = 'smem constant byte address 0x4 - core index']
  #allocation1 [shape = 'u32[144,128]{1,0:T(1,128)}', space=vmem, size = 0x12000, scoped, tag = 'internal scratch']
  #allocation2 [shape = 'f32[192,64]{1,0:T(8,128)}', space=vmem, size = 0x18000, scoped, tag = 'scratch operand']
  %s0 = inlined_call_operand.vmem [shape: f32[64,8], index: 0, kind: input, shape index: {}]
  %s1 = inlined_call_operand.vmem [shape: f32[128,8], index: 1, kind: input, shape index: {}]
  %s2 = inlined_call_operand.vmem [shape: f32[144,64], index: 2, kind: input, shape index: {}]
  %s3 = inlined_call_operand.vmem [shape: f32[8,64], index: 3, kind: input, shape index: {}]
  %s4 = inlined_call_operand.vmem [shape: f32[192,32], index: 4, kind: output, shape index: {}]
  %s5 = sld [smem:[#allocation0]]
  $region26: #{encoder_forward.1} parent=0
    _
  %s7 = ssub.s32 1, %s5
  %s8 = scalar_select 0, %s7, %s5
  // Predicated region
  $region2: #{encoder_forward.1} parent=0 // pred_check
    _
  $region3: #{encoder_forward.1} parent=0 // pred_check_branch
    %10 = sbr.rel (0) target = $region5
  $region4: #{encoder_forward.1} parent=0 // pred_region
    _
  $region5: #{encoder_forward.1} parent=0 // pred_fallthru
    _
  // Predicated region
  $region6: #{encoder_forward.1} parent=0 // pred_check
    _
  $region7: #{encoder_forward.1} parent=0 // pred_check_branch
    %12 = sbr.rel (0) target = $region9
  $region8: #{encoder_forward.1} parent=0 // pred_region
    _
  $region9: #{encoder_forward.1} parent=0 // pred_fallthru
    _
  // Predicated region
  $region10: #{encoder_forward.1} parent=0 // pred_check
    _
  $region11: #{encoder_forward.1} parent=0 // pred_check_branch
    %14 = sbr.rel (0) target = $region13
  $region12: #{encoder_forward.1} parent=0 // pred_region
    _
  $region13: #{encoder_forward.1} parent=0 // pred_fallthru
    _
  // Predicated region
  $region14: #{encoder_forward.1} parent=0 // pred_check
    _
  $region15: #{encoder_forward.1} parent=0 // pred_check_branch
    %16 = sbr.rel (0) target = $region17
  $region16: #{encoder_forward.1} parent=0 // pred_region
    _
  $region17: #{encoder_forward.1} parent=0 // pred_fallthru
    _
  %v17 = vld [vmem:[%s3] sm:$0x1]
  %v18 = vld [vmem:[%s3 + $0x1] sm:$0x1]
  %v19 = vld [vmem:[%s0] sm:$0xff]
  %v20 = vld [vmem:[%s0 + $0x8] sm:$0xff]
  %v21 = vld [vmem:[%s0 + $0x10] sm:$0xff]
  %v22 = vld [vmem:[%s0 + $0x18] sm:$0xff]
  %v23 = vld [vmem:[%s0 + $0x20] sm:$0xff]
  %v24 = vld [vmem:[%s0 + $0x28] sm:$0xff]
  %v25 = vld [vmem:[%s0 + $0x30] sm:$0xff]
  %v26 = vld [vmem:[%s0 + $0x38] sm:$0xff]
  %v27 = vld [vmem:[%s2] sm:$0xff]
  %v28 = vlaneseq
  %v29 = vshrl.u32 %v28, 7
  %v30 = vsub.s32 0, %v29
  %v31 = vrot.slane %v17, %v30
  %vm32 = vcmask 64512
  %v34 = vsel %vm32, %v19, 0
  %v37 = vsel %vm32, %v20, 0
  %v40 = vsel %vm32, %v21, 0
  %v43 = vsel %vm32, %v22, 0
  %v46 = vsel %vm32, %v23, 0
  %v49 = vsel %vm32, %v24, 0
  %v52 = vsel %vm32, %v25, 0
  %v55 = vsel %vm32, %v26, 0
  %57 = vmatprep.subr.mxu0 0.0
  %58 = vmatpush1.msra.mxu0 0.0
  %59 = vmatprep.subr.mxu0 0.0
  %60 = vmatpush1.msra.mxu0 0.0
  %61 = vmatprep.subr.mxu0 0.0
  %62 = vmatpush1.msra.mxu0 0.0
  %63 = vmatprep.subr.mxu0 0.0
  %64 = vmatpush1.msra.mxu0 0.0
  %65 = vmatprep.subr.mxu0 0.0
  %66 = vmatpush1.msra.mxu0 0.0
  %67 = vmatprep.subr.mxu0 0.0
  %68 = vmatpush1.msra.mxu0 0.0
  %69 = vmatprep.subr.mxu0 0.0
  %70 = vmatpush1.msra.mxu0 0.0
  %71 = vmatprep.subr.mxu0 0.0
  %72 = vmatpush1.msra.mxu0 0.0
  %73 = vmatprep.subr.mxu0 0.0
  %74 = vmatpush1.msra.mxu0 0.0
  %75 = vmatprep.subr.mxu0 0.0
  %76 = vmatpush1.msra.mxu0 0.0
  %77 = vmatprep.subr.mxu0 0.0
  %78 = vmatpush1.msra.mxu0 0.0
  %79 = vmatprep.subr.mxu0 0.0
  %80 = vmatpush1.msra.mxu0 0.0
  %81 = vmatprep.subr.mxu0 0.0
  %82 = vmatpush1.msra.mxu0 0.0
  %83 = vmatprep.subr.mxu0 0.0
  %84 = vmatpush1.msra.mxu0 0.0
  %85 = vmatprep.subr.mxu0 0.0
  %86 = vmatpush1.msra.mxu0 0.0
  %87 = vmatprep.subr.mxu0 0.0
  %88 = vmatpush1.msra.mxu0 %v27
  %89 = vmatprep.subr.mxu0 0.0
  %90 = vmatpush2.msra.mxu0 0.0
  %91 = vmatprep.subr.mxu0 0.0
  %92 = vmatpush2.msra.mxu0 0.0
  %93 = vmatprep.subr.mxu0 0.0
  %94 = vmatpush2.msra.mxu0 0.0
  %95 = vmatprep.subr.mxu0 0.0
  %96 = vmatpush2.msra.mxu0 0.0
  %97 = vmatprep.subr.mxu0 0.0
  %98 = vmatpush2.msra.mxu0 0.0
  %99 = vmatprep.subr.mxu0 0.0
  %100 = vmatpush2.msra.mxu0 0.0
  %101 = vmatprep.subr.mxu0 0.0
  %102 = vmatpush2.msra.mxu0 0.0
  %103 = vmatprep.subr.mxu0 0.0
  %104 = vmatpush2.msra.mxu0 0.0
  %105 = vmatprep.subr.mxu0 0.0
  %106 = vmatpush2.msra.mxu0 0.0
  %107 = vmatprep.subr.mxu0 0.0
  %108 = vmatpush2.msra.mxu0 0.0
  %109 = vmatprep.subr.mxu0 0.0
  %110 = vmatpush2.msra.mxu0 0.0
  %111 = vmatprep.subr.mxu0 0.0
  %112 = vmatpush2.msra.mxu0 0.0
  %113 = vmatprep.subr.mxu0 0.0
  %114 = vmatpush2.msra.mxu0 0.0
  %115 = vmatprep.subr.mxu0 0.0
  %116 = vmatpush2.msra.mxu0 0.0
  %117 = vmatprep.subr.mxu0 0.0
  %118 = vmatpush2.msra.mxu0 0.0
  %119 = vmatprep.subr.mxu0 0.0
  %120 = vmatpush2.msra.mxu0 0.0
  %121 = vmatprep.mubr.f32.mxu0 0.0
  %122 = vmatmul.mubr.f32.gmra.mxu0 %v34
  %v123 = vpop.f32.mrf.mxu0
  %v124 = vadd.f32 %v31, %v123
  %v125 = vpop.f32.mrf.mxu0
  %126 = vmatprep.mubr.f32.mxu0 0.0
  %127 = vmatmul.mubr.f32.gmra.mxu0 %v37
  %v128 = vpop.f32.mrf.mxu0
  %v129 = vadd.f32 %v31, %v128
  %v130 = vpop.f32.mrf.mxu0
  %131 = vmatprep.mubr.f32.mxu0 0.0
  %132 = vmatmul.mubr.f32.gmra.mxu0 %v40
  %v133 = vpop.f32.mrf.mxu0
  %v134 = vadd.f32 %v31, %v133
  %v135 = vpop.f32.mrf.mxu0
  %136 = vmatprep.mubr.f32.mxu0 0.0
  %137 = vmatmul.mubr.f32.gmra.mxu0 %v43
  %v138 = vpop.f32.mrf.mxu0
  %v139 = vadd.f32 %v31, %v138
  %v140 = vpop.f32.mrf.mxu0
  %141 = vmatprep.mubr.f32.mxu0 0.0
  %142 = vmatmul.mubr.f32.gmra.mxu0 %v46
  %v143 = vpop.f32.mrf.mxu0
  %v144 = vadd.f32 %v31, %v143
  %v145 = vpop.f32.mrf.mxu0
  %146 = vmatprep.mubr.f32.mxu0 0.0
  %147 = vmatmul.mubr.f32.gmra.mxu0 %v49
  %v148 = vpop.f32.mrf.mxu0
  %v149 = vadd.f32 %v31, %v148
  %v150 = vpop.f32.mrf.mxu0
  %151 = vmatprep.mubr.f32.mxu0 0.0
  %152 = vmatmul.mubr.f32.gmra.mxu0 %v52
  %v153 = vpop.f32.mrf.mxu0
  %v154 = vadd.f32 %v31, %v153
  %v155 = vpop.f32.mrf.mxu0
  %156 = vmatprep.mubr.f32.mxu0 0.0
  %157 = vmatmul.mubr.f32.gmra.mxu0 %v55
  %v158 = vpop.f32.mrf.mxu0
  %v159 = vadd.f32 %v31, %v158
  %v160 = vpop.f32.mrf.mxu0
  %161 = vdwg.mxu0
  %v162 = vmax.f32 %v124, 0.0
  %v163 = vmax.f32 %v129, 0.0
  %v164 = vmax.f32 %v134, 0.0
  %v165 = vmax.f32 %v139, 0.0
  %v166 = vmax.f32 %v144, 0.0
  %v167 = vmax.f32 %v149, 0.0
  %v168 = vmax.f32 %v154, 0.0
  %v169 = vmax.f32 %v159, 0.0
  %v170 = vld [vmem:[%s1] sm:$0xff]
  %v171 = vld [vmem:[%s1 + $0x8] sm:$0xff]
  %v172 = vld [vmem:[%s1 + $0x10] sm:$0xff]
  %v173 = vld [vmem:[%s1 + $0x18] sm:$0xff]
  %v174 = vld [vmem:[%s1 + $0x20] sm:$0xff]
  %v175 = vld [vmem:[%s1 + $0x28] sm:$0xff]
  %v176 = vld [vmem:[%s1 + $0x30] sm:$0xff]
  %v177 = vld [vmem:[%s1 + $0x38] sm:$0xff]
  %v178 = vld [vmem:[%s1 + $0x40] sm:$0xff]
  %v179 = vld [vmem:[%s1 + $0x48] sm:$0xff]
  %v180 = vld [vmem:[%s1 + $0x50] sm:$0xff]
  %v181 = vld [vmem:[%s1 + $0x58] sm:$0xff]
  %v182 = vld [vmem:[%s1 + $0x60] sm:$0xff]
  %v183 = vld [vmem:[%s1 + $0x68] sm:$0xff]
  %v184 = vld [vmem:[%s1 + $0x70] sm:$0xff]
  %v185 = vld [vmem:[%s1 + $0x78] sm:$0xff]
  %v186 = vld [vmem:[%s2 + $0x8] sm:$0xff]
  %v188 = vsel %vm32, %v170, 0
  %v191 = vsel %vm32, %v171, 0
  %v194 = vsel %vm32, %v172, 0
  %v197 = vsel %vm32, %v173, 0
  %v200 = vsel %vm32, %v174, 0
  %v203 = vsel %vm32, %v175, 0
  %v206 = vsel %vm32, %v176, 0
  %v209 = vsel %vm32, %v177, 0
  %v212 = vsel %vm32, %v178, 0
  %v215 = vsel %vm32, %v179, 0
  %v218 = vsel %vm32, %v180, 0
  %v221 = vsel %vm32, %v181, 0
  %v224 = vsel %vm32, %v182, 0
  %v227 = vsel %vm32, %v183, 0
  %v230 = vsel %vm32, %v184, 0
  %v233 = vsel %vm32, %v185, 0
  %235 = vmatprep.subr.mxu0 0.0
  %236 = vmatpush1.msra.mxu0 0.0
  %237 = vmatprep.subr.mxu0 0.0
  %238 = vmatpush1.msra.mxu0 0.0
  %239 = vmatprep.subr.mxu0 0.0
  %240 = vmatpush1.msra.mxu0 0.0
  %241 = vmatprep.subr.mxu0 0.0
  %242 = vmatpush1.msra.mxu0 0.0
  %243 = vmatprep.subr.mxu0 0.0
  %244 = vmatpush1.msra.mxu0 0.0
  %245 = vmatprep.subr.mxu0 0.0
  %246 = vmatpush1.msra.mxu0 0.0
  %247 = vmatprep.subr.mxu0 0.0
  %248 = vmatpush1.msra.mxu0 0.0
  %249 = vmatprep.subr.mxu0 0.0
  %250 = vmatpush1.msra.mxu0 0.0
  %251 = vmatprep.subr.mxu0 0.0
  %252 = vmatpush1.msra.mxu0 0.0
  %253 = vmatprep.subr.mxu0 0.0
  %254 = vmatpush1.msra.mxu0 0.0
  %255 = vmatprep.subr.mxu0 0.0
  %256 = vmatpush1.msra.mxu0 0.0
  %257 = vmatprep.subr.mxu0 0.0
  %258 = vmatpush1.msra.mxu0 0.0
  %259 = vmatprep.subr.mxu0 0.0
  %260 = vmatpush1.msra.mxu0 0.0
  %261 = vmatprep.subr.mxu0 0.0
  %262 = vmatpush1.msra.mxu0 0.0
  %263 = vmatprep.subr.mxu0 0.0
  %264 = vmatpush1.msra.mxu0 0.0
  %265 = vmatprep.subr.mxu0 0.0
  %266 = vmatpush1.msra.mxu0 %v186
  %267 = vmatprep.subr.mxu0 0.0
  %268 = vmatpush2.msra.mxu0 0.0
  %269 = vmatprep.subr.mxu0 0.0
  %270 = vmatpush2.msra.mxu0 0.0
  %271 = vmatprep.subr.mxu0 0.0
  %272 = vmatpush2.msra.mxu0 0.0
  %273 = vmatprep.subr.mxu0 0.0
  %274 = vmatpush2.msra.mxu0 0.0
  %275 = vmatprep.subr.mxu0 0.0
  %276 = vmatpush2.msra.mxu0 0.0
  %277 = vmatprep.subr.mxu0 0.0
  %278 = vmatpush2.msra.mxu0 0.0
  %279 = vmatprep.subr.mxu0 0.0
  %280 = vmatpush2.msra.mxu0 0.0
  %281 = vmatprep.subr.mxu0 0.0
  %282 = vmatpush2.msra.mxu0 0.0
  %283 = vmatprep.subr.mxu0 0.0
  %284 = vmatpush2.msra.mxu0 0.0
  %285 = vmatprep.subr.mxu0 0.0
  %286 = vmatpush2.msra.mxu0 0.0
  %287 = vmatprep.subr.mxu0 0.0
  %288 = vmatpush2.msra.mxu0 0.0
  %289 = vmatprep.subr.mxu0 0.0
  %290 = vmatpush2.msra.mxu0 0.0
  %291 = vmatprep.subr.mxu0 0.0
  %292 = vmatpush2.msra.mxu0 0.0
  %293 = vmatprep.subr.mxu0 0.0
  %294 = vmatpush2.msra.mxu0 0.0
  %295 = vmatprep.subr.mxu0 0.0
  %296 = vmatpush2.msra.mxu0 0.0
  %297 = vmatprep.subr.mxu0 0.0
  %298 = vmatpush2.msra.mxu0 0.0
  %299 = vmatprep.mubr.f32.mxu0 0.0
  %300 = vmatmul.mubr.f32.gmra.mxu0 %v188
  %v301 = vpop.f32.mrf.mxu0
  %v302 = vadd.f32 %v31, %v301
  %v303 = vpop.f32.mrf.mxu0
  %304 = vmatprep.mubr.f32.mxu0 0.0
  %305 = vmatmul.mubr.f32.gmra.mxu0 %v191
  %v306 = vpop.f32.mrf.mxu0
  %v307 = vadd.f32 %v31, %v306
  %v308 = vpop.f32.mrf.mxu0
  %309 = vmatprep.mubr.f32.mxu0 0.0
  %310 = vmatmul.mubr.f32.gmra.mxu0 %v194
  %v311 = vpop.f32.mrf.mxu0
  %v312 = vadd.f32 %v31, %v311
  %v313 = vpop.f32.mrf.mxu0
  %314 = vmatprep.mubr.f32.mxu0 0.0
  %315 = vmatmul.mubr.f32.gmra.mxu0 %v197
  %v316 = vpop.f32.mrf.mxu0
  %v317 = vadd.f32 %v31, %v316
  %v318 = vpop.f32.mrf.mxu0
  %319 = vmatprep.mubr.f32.mxu0 0.0
  %320 = vmatmul.mubr.f32.gmra.mxu0 %v200
  %v321 = vpop.f32.mrf.mxu0
  %v322 = vadd.f32 %v31, %v321
  %v323 = vpop.f32.mrf.mxu0
  %324 = vmatprep.mubr.f32.mxu0 0.0
  %325 = vmatmul.mubr.f32.gmra.mxu0 %v203
  %v326 = vpop.f32.mrf.mxu0
  %v327 = vadd.f32 %v31, %v326
  %v328 = vpop.f32.mrf.mxu0
  %329 = vmatprep.mubr.f32.mxu0 0.0
  %330 = vmatmul.mubr.f32.gmra.mxu0 %v206
  %v331 = vpop.f32.mrf.mxu0
  %v332 = vadd.f32 %v31, %v331
  %v333 = vpop.f32.mrf.mxu0
  %334 = vmatprep.mubr.f32.mxu0 0.0
  %335 = vmatmul.mubr.f32.gmra.mxu0 %v209
  %v336 = vpop.f32.mrf.mxu0
  %v337 = vadd.f32 %v31, %v336
  %v338 = vpop.f32.mrf.mxu0
  %339 = vmatprep.mubr.f32.mxu0 0.0
  %340 = vmatmul.mubr.f32.gmra.mxu0 %v212
  %v341 = vpop.f32.mrf.mxu0
  %v342 = vadd.f32 %v31, %v341
  %v343 = vpop.f32.mrf.mxu0
  %344 = vmatprep.mubr.f32.mxu0 0.0
  %345 = vmatmul.mubr.f32.gmra.mxu0 %v215
  %v346 = vpop.f32.mrf.mxu0
  %v347 = vadd.f32 %v31, %v346
  %v348 = vpop.f32.mrf.mxu0
  %349 = vmatprep.mubr.f32.mxu0 0.0
  %350 = vmatmul.mubr.f32.gmra.mxu0 %v218
  %v351 = vpop.f32.mrf.mxu0
  %v352 = vadd.f32 %v31, %v351
  %v353 = vpop.f32.mrf.mxu0
  %354 = vmatprep.mubr.f32.mxu0 0.0
  %355 = vmatmul.mubr.f32.gmra.mxu0 %v221
  %v356 = vpop.f32.mrf.mxu0
  %v357 = vadd.f32 %v31, %v356
  %v358 = vpop.f32.mrf.mxu0
  %359 = vmatprep.mubr.f32.mxu0 0.0
  %360 = vmatmul.mubr.f32.gmra.mxu0 %v224
  %v361 = vpop.f32.mrf.mxu0
  %v362 = vadd.f32 %v31, %v361
  %v363 = vpop.f32.mrf.mxu0
  %364 = vmatprep.mubr.f32.mxu0 0.0
  %365 = vmatmul.mubr.f32.gmra.mxu0 %v227
  %v366 = vpop.f32.mrf.mxu0
  %v367 = vadd.f32 %v31, %v366
  %v368 = vpop.f32.mrf.mxu0
  %369 = vmatprep.mubr.f32.mxu0 0.0
  %370 = vmatmul.mubr.f32.gmra.mxu0 %v230
  %v371 = vpop.f32.mrf.mxu0
  %v372 = vadd.f32 %v31, %v371
  %v373 = vpop.f32.mrf.mxu0
  %374 = vmatprep.mubr.f32.mxu0 0.0
  %375 = vmatmul.mubr.f32.gmra.mxu0 %v233
  %v376 = vpop.f32.mrf.mxu0
  %v377 = vadd.f32 %v31, %v376
  %v378 = vpop.f32.mrf.mxu0
  %379 = vdwg.mxu0
  %v380 = vmax.f32 %v302, 0.0
  %v381 = vmax.f32 %v307, 0.0
  %v382 = vmax.f32 %v312, 0.0
  %v383 = vmax.f32 %v317, 0.0
  %v384 = vmax.f32 %v322, 0.0
  %v385 = vmax.f32 %v327, 0.0
  %v386 = vmax.f32 %v332, 0.0
  %v387 = vmax.f32 %v337, 0.0
  %v388 = vmax.f32 %v342, 0.0
  %v389 = vmax.f32 %v347, 0.0
  %v390 = vmax.f32 %v352, 0.0
  %v391 = vmax.f32 %v357, 0.0
  %v392 = vmax.f32 %v362, 0.0
  %v393 = vmax.f32 %v367, 0.0
  %v394 = vmax.f32 %v372, 0.0
  %v395 = vmax.f32 %v377, 0.0
  %vm396 = vcmask 523264
  %397 = vst.msk [vmem:[#allocation2] sm:$0xff] %vm396, %v162
  %398 = vst.msk [vmem:[#allocation2 + $0x8] sm:$0xff] %vm396, %v163
  %399 = vst.msk [vmem:[#allocation2 + $0x10] sm:$0xff] %vm396, %v164
  %400 = vst.msk [vmem:[#allocation2 + $0x18] sm:$0xff] %vm396, %v165
  %401 = vst.msk [vmem:[#allocation2 + $0x20] sm:$0xff] %vm396, %v166
  %402 = vst.msk [vmem:[#allocation2 + $0x28] sm:$0xff] %vm396, %v167
  %403 = vst.msk [vmem:[#allocation2 + $0x30] sm:$0xff] %vm396, %v168
  %404 = vst.msk [vmem:[#allocation2 + $0x38] sm:$0xff] %vm396, %v169
  %405 = vst.msk [vmem:[#allocation2 + $0x40] sm:$0xff] %vm396, %v380
  %406 = vst.msk [vmem:[#allocation2 + $0x48] sm:$0xff] %vm396, %v381
  %407 = vst.msk [vmem:[#allocation2 + $0x50] sm:$0xff] %vm396, %v382
  %408 = vst.msk [vmem:[#allocation2 + $0x58] sm:$0xff] %vm396, %v383
  %409 = vst.msk [vmem:[#allocation2 + $0x60] sm:$0xff] %vm396, %v384
  %410 = vst.msk [vmem:[#allocation2 + $0x68] sm:$0xff] %vm396, %v385
  %411 = vst.msk [vmem:[#allocation2 + $0x70] sm:$0xff] %vm396, %v386
  %412 = vst.msk [vmem:[#allocation2 + $0x78] sm:$0xff] %vm396, %v387
  %413 = vst.msk [vmem:[#allocation2 + $0x80] sm:$0xff] %vm396, %v388
  %414 = vst.msk [vmem:[#allocation2 + $0x88] sm:$0xff] %vm396, %v389
  %415 = vst.msk [vmem:[#allocation2 + $0x90] sm:$0xff] %vm396, %v390
  %416 = vst.msk [vmem:[#allocation2 + $0x98] sm:$0xff] %vm396, %v391
  %417 = vst.msk [vmem:[#allocation2 + $0xa0] sm:$0xff] %vm396, %v392
  %418 = vst.msk [vmem:[#allocation2 + $0xa8] sm:$0xff] %vm396, %v393
  %419 = vst.msk [vmem:[#allocation2 + $0xb0] sm:$0xff] %vm396, %v394
  %420 = vst.msk [vmem:[#allocation2 + $0xb8] sm:$0xff] %vm396, %v395
  %v421 = vld [vmem:[#allocation2] sm:$0xff]
  %v422 = vld [vmem:[#allocation2 + $0x8] sm:$0xff]
  %v423 = vld [vmem:[#allocation2 + $0x10] sm:$0xff]
  %v424 = vld [vmem:[#allocation2 + $0x18] sm:$0xff]
  %v425 = vld [vmem:[#allocation2 + $0x20] sm:$0xff]
  %v426 = vld [vmem:[#allocation2 + $0x28] sm:$0xff]
  %v427 = vld [vmem:[#allocation2 + $0x30] sm:$0xff]
  %v428 = vld [vmem:[#allocation2 + $0x38] sm:$0xff]
  %v429 = vld [vmem:[#allocation2 + $0x40] sm:$0xff]
  %v430 = vld [vmem:[#allocation2 + $0x48] sm:$0xff]
  %v431 = vld [vmem:[#allocation2 + $0x50] sm:$0xff]
  %v432 = vld [vmem:[#allocation2 + $0x58] sm:$0xff]
  %v433 = vld [vmem:[#allocation2 + $0x60] sm:$0xff]
  %v434 = vld [vmem:[#allocation2 + $0x68] sm:$0xff]
  %v435 = vld [vmem:[#allocation2 + $0x70] sm:$0xff]
  %v436 = vld [vmem:[#allocation2 + $0x78] sm:$0xff]
  %v437 = vld [vmem:[#allocation2 + $0x80] sm:$0xff]
  %v438 = vld [vmem:[#allocation2 + $0x88] sm:$0xff]
  %v439 = vld [vmem:[#allocation2 + $0x90] sm:$0xff]
  %v440 = vld [vmem:[#allocation2 + $0x98] sm:$0xff]
  %v441 = vld [vmem:[#allocation2 + $0xa0] sm:$0xff]
  %v442 = vld [vmem:[#allocation2 + $0xa8] sm:$0xff]
  %v443 = vld [vmem:[#allocation2 + $0xb0] sm:$0xff]
  %v444 = vld [vmem:[#allocation2 + $0xb8] sm:$0xff]
  %v445 = vld [vmem:[%s2 + $0x10] sm:$0xff]
  %v446 = vld [vmem:[%s2 + $0x18] sm:$0xff]
  %v447 = vld [vmem:[%s2 + $0x20] sm:$0xff]
  %v448 = vld [vmem:[%s2 + $0x28] sm:$0xff]
  %v449 = vld [vmem:[%s2 + $0x30] sm:$0xff]
  %v450 = vld [vmem:[%s2 + $0x38] sm:$0xff]
  %v451 = vld [vmem:[%s2 + $0x40] sm:$0xff]
  %v452 = vld [vmem:[%s2 + $0x48] sm:$0xff]
  %v453 = vlaneseq
  %v454 = vshrl.u32 %v453, 7
  %v455 = vsub.s32 0, %v454
  %v456 = vrot.slane %v18, %v455
  %v458 = vsel %vm396, %v421, 0
  %v461 = vsel %vm396, %v422, 0
  %v464 = vsel %vm396, %v423, 0
  %v467 = vsel %vm396, %v424, 0
  %v470 = vsel %vm396, %v425, 0
  %v473 = vsel %vm396, %v426, 0
  %v476 = vsel %vm396, %v427, 0
  %v479 = vsel %vm396, %v428, 0
  %v482 = vsel %vm396, %v429, 0
  %v485 = vsel %vm396, %v430, 0
  %v488 = vsel %vm396, %v431, 0
  %v491 = vsel %vm396, %v432, 0
  %v494 = vsel %vm396, %v433, 0
  %v497 = vsel %vm396, %v434, 0
  %v500 = vsel %vm396, %v435, 0
  %v503 = vsel %vm396, %v436, 0
  %v506 = vsel %vm396, %v437, 0
  %v509 = vsel %vm396, %v438, 0
  %v512 = vsel %vm396, %v439, 0
  %v515 = vsel %vm396, %v440, 0
  %v518 = vsel %vm396, %v441, 0
  %v521 = vsel %vm396, %v442, 0
  %v524 = vsel %vm396, %v443, 0
  %v527 = vsel %vm396, %v444, 0
  %529 = vmatprep.subr.mxu0 0.0
  %530 = vmatpush1.msra.mxu0 0.0
  %531 = vmatprep.subr.mxu0 0.0
  %532 = vmatpush1.msra.mxu0 0.0
  %533 = vmatprep.subr.mxu0 0.0
  %534 = vmatpush1.msra.mxu0 0.0
  %535 = vmatprep.subr.mxu0 0.0
  %536 = vmatpush1.msra.mxu0 0.0
  %537 = vmatprep.subr.mxu0 0.0
  %538 = vmatpush1.msra.mxu0 0.0
  %539 = vmatprep.subr.mxu0 0.0
  %540 = vmatpush1.msra.mxu0 0.0
  %541 = vmatprep.subr.mxu0 0.0
  %542 = vmatpush1.msra.mxu0 0.0
  %543 = vmatprep.subr.mxu0 0.0
  %544 = vmatpush1.msra.mxu0 0.0
  %545 = vmatprep.subr.mxu0 0.0
  %546 = vmatpush1.msra.mxu0 %v452
  %547 = vmatprep.subr.mxu0 0.0
  %548 = vmatpush1.msra.mxu0 %v451
  %549 = vmatprep.subr.mxu0 0.0
  %550 = vmatpush1.msra.mxu0 %v450
  %551 = vmatprep.subr.mxu0 0.0
  %552 = vmatpush1.msra.mxu0 %v449
  %553 = vmatprep.subr.mxu0 0.0
  %554 = vmatpush1.msra.mxu0 %v448
  %555 = vmatprep.subr.mxu0 0.0
  %556 = vmatpush1.msra.mxu0 %v447
  %557 = vmatprep.subr.mxu0 0.0
  %558 = vmatpush1.msra.mxu0 %v446
  %559 = vmatprep.subr.mxu0 0.0
  %560 = vmatpush1.msra.mxu0 %v445
  %561 = vmatprep.subr.mxu0 0.0
  %562 = vmatpush2.msra.mxu0 0.0
  %563 = vmatprep.subr.mxu0 0.0
  %564 = vmatpush2.msra.mxu0 0.0
  %565 = vmatprep.subr.mxu0 0.0
  %566 = vmatpush2.msra.mxu0 0.0
  %567 = vmatprep.subr.mxu0 0.0
  %568 = vmatpush2.msra.mxu0 0.0
  %569 = vmatprep.subr.mxu0 0.0
  %570 = vmatpush2.msra.mxu0 0.0
  %571 = vmatprep.subr.mxu0 0.0
  %572 = vmatpush2.msra.mxu0 0.0
  %573 = vmatprep.subr.mxu0 0.0
  %574 = vmatpush2.msra.mxu0 0.0
  %575 = vmatprep.subr.mxu0 0.0
  %576 = vmatpush2.msra.mxu0 0.0
  %577 = vmatprep.subr.mxu0 0.0
  %578 = vmatpush2.msra.mxu0 0.0
  %579 = vmatprep.subr.mxu0 0.0
  %580 = vmatpush2.msra.mxu0 0.0
  %581 = vmatprep.subr.mxu0 0.0
  %582 = vmatpush2.msra.mxu0 0.0
  %583 = vmatprep.subr.mxu0 0.0
  %584 = vmatpush2.msra.mxu0 0.0
  %585 = vmatprep.subr.mxu0 0.0
  %586 = vmatpush2.msra.mxu0 0.0
  %587 = vmatprep.subr.mxu0 0.0
  %588 = vmatpush2.msra.mxu0 0.0
  %589 = vmatprep.subr.mxu0 0.0
  %590 = vmatpush2.msra.mxu0 0.0
  %591 = vmatprep.subr.mxu0 0.0
  %592 = vmatpush2.msra.mxu0 0.0
  %593 = vmatprep.mubr.f32.mxu0 0.0
  %594 = vmatmul.mubr.f32.gmra.mxu0 %v458
  %v595 = vpop.f32.mrf.mxu0
  %v596 = vadd.f32 %v456, %v595
  %v597 = vpop.f32.mrf.mxu0
  %598 = vmatprep.mubr.f32.mxu0 0.0
  %599 = vmatmul.mubr.f32.gmra.mxu0 %v461
  %v600 = vpop.f32.mrf.mxu0
  %v601 = vadd.f32 %v456, %v600
  %v602 = vpop.f32.mrf.mxu0
  %603 = vmatprep.mubr.f32.mxu0 0.0
  %604 = vmatmul.mubr.f32.gmra.mxu0 %v464
  %v605 = vpop.f32.mrf.mxu0
  %v606 = vadd.f32 %v456, %v605
  %v607 = vpop.f32.mrf.mxu0
  %608 = vmatprep.mubr.f32.mxu0 0.0
  %609 = vmatmul.mubr.f32.gmra.mxu0 %v467
  %v610 = vpop.f32.mrf.mxu0
  %v611 = vadd.f32 %v456, %v610
  %v612 = vpop.f32.mrf.mxu0
  %613 = vmatprep.mubr.f32.mxu0 0.0
  %614 = vmatmul.mubr.f32.gmra.mxu0 %v470
  %v615 = vpop.f32.mrf.mxu0
  %v616 = vadd.f32 %v456, %v615
  %v617 = vpop.f32.mrf.mxu0
  %618 = vmatprep.mubr.f32.mxu0 0.0
  %619 = vmatmul.mubr.f32.gmra.mxu0 %v473
  %v620 = vpop.f32.mrf.mxu0
  %v621 = vadd.f32 %v456, %v620
  %v622 = vpop.f32.mrf.mxu0
  %623 = vmatprep.mubr.f32.mxu0 0.0
  %624 = vmatmul.mubr.f32.gmra.mxu0 %v476
  %v625 = vpop.f32.mrf.mxu0
  %v626 = vadd.f32 %v456, %v625
  %v627 = vpop.f32.mrf.mxu0
  %628 = vmatprep.mubr.f32.mxu0 0.0
  %629 = vmatmul.mubr.f32.gmra.mxu0 %v479
  %v630 = vpop.f32.mrf.mxu0
  %v631 = vadd.f32 %v456, %v630
  %v632 = vpop.f32.mrf.mxu0
  %633 = vmatprep.mubr.f32.mxu0 0.0
  %634 = vmatmul.mubr.f32.gmra.mxu0 %v482
  %v635 = vpop.f32.mrf.mxu0
  %v636 = vadd.f32 %v456, %v635
  %v637 = vpop.f32.mrf.mxu0
  %638 = vmatprep.mubr.f32.mxu0 0.0
  %639 = vmatmul.mubr.f32.gmra.mxu0 %v485
  %v640 = vpop.f32.mrf.mxu0
  %v641 = vadd.f32 %v456, %v640
  %v642 = vpop.f32.mrf.mxu0
  %643 = vmatprep.mubr.f32.mxu0 0.0
  %644 = vmatmul.mubr.f32.gmra.mxu0 %v488
  %v645 = vpop.f32.mrf.mxu0
  %v646 = vadd.f32 %v456, %v645
  %v647 = vpop.f32.mrf.mxu0
  %648 = vmatprep.mubr.f32.mxu0 0.0
  %649 = vmatmul.mubr.f32.gmra.mxu0 %v491
  %v650 = vpop.f32.mrf.mxu0
  %v651 = vadd.f32 %v456, %v650
  %v652 = vpop.f32.mrf.mxu0
  %653 = vmatprep.mubr.f32.mxu0 0.0
  %654 = vmatmul.mubr.f32.gmra.mxu0 %v494
  %v655 = vpop.f32.mrf.mxu0
  %v656 = vadd.f32 %v456, %v655
  %v657 = vpop.f32.mrf.mxu0
  %658 = vmatprep.mubr.f32.mxu0 0.0
  %659 = vmatmul.mubr.f32.gmra.mxu0 %v497
  %v660 = vpop.f32.mrf.mxu0
  %v661 = vadd.f32 %v456, %v660
  %v662 = vpop.f32.mrf.mxu0
  %663 = vmatprep.mubr.f32.mxu0 0.0
  %664 = vmatmul.mubr.f32.gmra.mxu0 %v500
  %v665 = vpop.f32.mrf.mxu0
  %v666 = vadd.f32 %v456, %v665
  %v667 = vpop.f32.mrf.mxu0
  %668 = vmatprep.mubr.f32.mxu0 0.0
  %669 = vmatmul.mubr.f32.gmra.mxu0 %v503
  %v670 = vpop.f32.mrf.mxu0
  %v671 = vadd.f32 %v456, %v670
  %v672 = vpop.f32.mrf.mxu0
  %673 = vmatprep.mubr.f32.mxu0 0.0
  %674 = vmatmul.mubr.f32.gmra.mxu0 %v506
  %v675 = vpop.f32.mrf.mxu0
  %v676 = vadd.f32 %v456, %v675
  %v677 = vpop.f32.mrf.mxu0
  %678 = vmatprep.mubr.f32.mxu0 0.0
  %679 = vmatmul.mubr.f32.gmra.mxu0 %v509
  %v680 = vpop.f32.mrf.mxu0
  %v681 = vadd.f32 %v456, %v680
  %v682 = vpop.f32.mrf.mxu0
  %683 = vmatprep.mubr.f32.mxu0 0.0
  %684 = vmatmul.mubr.f32.gmra.mxu0 %v512
  %v685 = vpop.f32.mrf.mxu0
  %v686 = vadd.f32 %v456, %v685
  %v687 = vpop.f32.mrf.mxu0
  %688 = vmatprep.mubr.f32.mxu0 0.0
  %689 = vmatmul.mubr.f32.gmra.mxu0 %v515
  %v690 = vpop.f32.mrf.mxu0
  %v691 = vadd.f32 %v456, %v690
  %v692 = vpop.f32.mrf.mxu0
  %693 = vmatprep.mubr.f32.mxu0 0.0
  %694 = vmatmul.mubr.f32.gmra.mxu0 %v518
  %v695 = vpop.f32.mrf.mxu0
  %v696 = vadd.f32 %v456, %v695
  %v697 = vpop.f32.mrf.mxu0
  %698 = vmatprep.mubr.f32.mxu0 0.0
  %699 = vmatmul.mubr.f32.gmra.mxu0 %v521
  %v700 = vpop.f32.mrf.mxu0
  %v701 = vadd.f32 %v456, %v700
  %v702 = vpop.f32.mrf.mxu0
  %703 = vmatprep.mubr.f32.mxu0 0.0
  %704 = vmatmul.mubr.f32.gmra.mxu0 %v524
  %v705 = vpop.f32.mrf.mxu0
  %v706 = vadd.f32 %v456, %v705
  %v707 = vpop.f32.mrf.mxu0
  %708 = vmatprep.mubr.f32.mxu0 0.0
  %709 = vmatmul.mubr.f32.gmra.mxu0 %v527
  %v710 = vpop.f32.mrf.mxu0
  %v711 = vadd.f32 %v456, %v710
  %v712 = vpop.f32.mrf.mxu0
  %713 = vdwg.mxu0
  %v714 = vmax.f32 %v596, 0.0
  %v715 = vmax.f32 %v601, 0.0
  %v716 = vmax.f32 %v606, 0.0
  %v717 = vmax.f32 %v611, 0.0
  %v718 = vmax.f32 %v616, 0.0
  %v719 = vmax.f32 %v621, 0.0
  %v720 = vmax.f32 %v626, 0.0
  %v721 = vmax.f32 %v631, 0.0
  %v722 = vmax.f32 %v636, 0.0
  %v723 = vmax.f32 %v641, 0.0
  %v724 = vmax.f32 %v646, 0.0
  %v725 = vmax.f32 %v651, 0.0
  %v726 = vmax.f32 %v656, 0.0
  %v727 = vmax.f32 %v661, 0.0
  %v728 = vmax.f32 %v666, 0.0
  %v729 = vmax.f32 %v671, 0.0
  %v730 = vmax.f32 %v676, 0.0
  %v731 = vmax.f32 %v681, 0.0
  %v732 = vmax.f32 %v686, 0.0
  %v733 = vmax.f32 %v691, 0.0
  %v734 = vmax.f32 %v696, 0.0
  %v735 = vmax.f32 %v701, 0.0
  %v736 = vmax.f32 %v706, 0.0
  %v737 = vmax.f32 %v711, 0.0
  %v738 = vlaneseq
  %v739 = vshrl.u32 %v738, 7
  %v740 = vadd.s32 %v739, 8
  %v741 = vadd.s32 %v739, 16
  %v742 = vadd.s32 %v739, 24
  %v743 = vadd.s32 %v739, 32
  %v744 = vadd.s32 %v739, 40
  %v745 = vadd.s32 %v739, 48
  %v746 = vadd.s32 %v739, 56
  %v747 = vadd.s32 %v739, 64
  %v748 = vadd.s32 %v739, 72
  %v749 = vadd.s32 %v739, 80
  %v750 = vadd.s32 %v739, 88
  %v751 = vadd.s32 %v739, 96
  %v752 = vadd.s32 %v739, 104
  %v753 = vadd.s32 %v739, 112
  %v754 = vadd.s32 %v739, 120
  %v755 = vadd.s32 %v739, 128
  %v756 = vadd.s32 %v739, 136
  %v757 = vadd.s32 %v739, 144
  %v758 = vadd.s32 %v739, 152
  %v759 = vadd.s32 %v739, 160
  %v760 = vadd.s32 %v739, 168
  %v761 = vadd.s32 %v739, 176
  %v762 = vadd.s32 %v739, 184
  %v763 = vlaneseq
  %v764 = vand.u32 %v763, 127
  %vm765 = vcmp.lt.s32.totalorder %v739, 64
  %vm766 = vcmp.lt.s32.totalorder %v740, 64
  %vm767 = vcmp.lt.s32.totalorder %v741, 64
  %vm768 = vcmp.lt.s32.totalorder %v742, 64
  %vm769 = vcmp.lt.s32.totalorder %v743, 64
  %vm770 = vcmp.lt.s32.totalorder %v744, 64
  %vm771 = vcmp.lt.s32.totalorder %v745, 64
  %vm772 = vcmp.lt.s32.totalorder %v746, 64
  %vm773 = vcmp.lt.s32.totalorder %v747, 64
  %vm774 = vcmp.lt.s32.totalorder %v748, 64
  %vm775 = vcmp.lt.s32.totalorder %v749, 64
  %vm776 = vcmp.lt.s32.totalorder %v750, 64
  %vm777 = vcmp.lt.s32.totalorder %v751, 64
  %vm778 = vcmp.lt.s32.totalorder %v752, 64
  %vm779 = vcmp.lt.s32.totalorder %v753, 64
  %vm780 = vcmp.lt.s32.totalorder %v754, 64
  %vm781 = vcmp.lt.s32.totalorder %v755, 64
  %vm782 = vcmp.lt.s32.totalorder %v756, 64
  %vm783 = vcmp.lt.s32.totalorder %v757, 64
  %vm784 = vcmp.lt.s32.totalorder %v758, 64
  %vm785 = vcmp.lt.s32.totalorder %v759, 64
  %vm786 = vcmp.lt.s32.totalorder %v760, 64
  %vm787 = vcmp.lt.s32.totalorder %v761, 64
  %vm788 = vcmp.lt.s32.totalorder %v762, 64
  %vm789 = vcmp.lt.s32.totalorder %v764, 32
  %vm790 = vmxor %vm765, %vm789
  %vm791 = vmxor %vm766, %vm789
  %vm792 = vmxor %vm767, %vm789
  %vm793 = vmxor %vm768, %vm789
  %vm794 = vmxor %vm769, %vm789
  %vm795 = vmxor %vm770, %vm789
  %vm796 = vmxor %vm771, %vm789
  %vm797 = vmxor %vm772, %vm789
  %vm798 = vmxor %vm773, %vm789
  %vm799 = vmxor %vm774, %vm789
  %vm800 = vmxor %vm775, %vm789
  %vm801 = vmxor %vm776, %vm789
  %vm802 = vmxor %vm777, %vm789
  %vm803 = vmxor %vm778, %vm789
  %vm804 = vmxor %vm779, %vm789
  %vm805 = vmxor %vm780, %vm789
  %vm806 = vmxor %vm781, %vm789
  %vm807 = vmxor %vm782, %vm789
  %vm808 = vmxor %vm783, %vm789
  %vm809 = vmxor %vm784, %vm789
  %vm810 = vmxor %vm785, %vm789
  %vm811 = vmxor %vm786, %vm789
  %vm812 = vmxor %vm787, %vm789
  %vm813 = vmxor %vm788, %vm789
  %vm814 = vmxor %vm790, 1
  %vm815 = vmxor %vm791, 1
  %vm816 = vmxor %vm792, 1
  %vm817 = vmxor %vm793, 1
  %vm818 = vmxor %vm794, 1
  %vm819 = vmxor %vm795, 1
  %vm820 = vmxor %vm796, 1
  %vm821 = vmxor %vm797, 1
  %vm822 = vmxor %vm798, 1
  %vm823 = vmxor %vm799, 1
  %vm824 = vmxor %vm800, 1
  %vm825 = vmxor %vm801, 1
  %vm826 = vmxor %vm802, 1
  %vm827 = vmxor %vm803, 1
  %vm828 = vmxor %vm804, 1
  %vm829 = vmxor %vm805, 1
  %vm830 = vmxor %vm806, 1
  %vm831 = vmxor %vm807, 1
  %vm832 = vmxor %vm808, 1
  %vm833 = vmxor %vm809, 1
  %vm834 = vmxor %vm810, 1
  %vm835 = vmxor %vm811, 1
  %vm836 = vmxor %vm812, 1
  %vm837 = vmxor %vm813, 1
  %v838 = vsel %vm814, %v714, 0.0
  %v839 = vsel %vm815, %v715, 0.0
  %v840 = vsel %vm816, %v716, 0.0
  %v841 = vsel %vm817, %v717, 0.0
  %v842 = vsel %vm818, %v718, 0.0
  %v843 = vsel %vm819, %v719, 0.0
  %v844 = vsel %vm820, %v720, 0.0
  %v845 = vsel %vm821, %v721, 0.0
  %v846 = vsel %vm822, %v722, 0.0
  %v847 = vsel %vm823, %v723, 0.0
  %v848 = vsel %vm824, %v724, 0.0
  %v849 = vsel %vm825, %v725, 0.0
  %v850 = vsel %vm826, %v726, 0.0
  %v851 = vsel %vm827, %v727, 0.0
  %v852 = vsel %vm828, %v728, 0.0
  %v853 = vsel %vm829, %v729, 0.0
  %v854 = vsel %vm830, %v730, 0.0
  %v855 = vsel %vm831, %v731, 0.0
  %v856 = vsel %vm832, %v732, 0.0
  %v857 = vsel %vm833, %v733, 0.0
  %v858 = vsel %vm834, %v734, 0.0
  %v859 = vsel %vm835, %v735, 0.0
  %v860 = vsel %vm836, %v736, 0.0
  %v861 = vsel %vm837, %v737, 0.0
  %v862 = vld [vmem:[%s3 + $0x2] sm:$0x1]
  %v863 = vld [vmem:[%s3 + $0x3] sm:$0x1]
  %v864 = vlaneseq
  %v865 = vshrl.u32 %v864, 7
  %v866 = vsub.s32 0, %v865
  %v867 = vrot.slane %v862, %v866
  %v868 = vlaneseq
  %v869 = vshrl.u32 %v868, 7
  %v870 = vsub.s32 0, %v869
  %v871 = vrot.slane %v863, %v870
  %v872 = vsel %vm765, %v867, %v871
  %v873 = vsel %vm766, %v867, %v871
  %v874 = vsel %vm767, %v867, %v871
  %v875 = vsel %vm768, %v867, %v871
  %v876 = vsel %vm769, %v867, %v871
  %v877 = vsel %vm770, %v867, %v871
  %v878 = vsel %vm771, %v867, %v871
  %v879 = vsel %vm772, %v867, %v871
  %v880 = vsel %vm773, %v867, %v871
  %v881 = vsel %vm774, %v867, %v871
  %v882 = vsel %vm775, %v867, %v871
  %v883 = vsel %vm776, %v867, %v871
  %v884 = vsel %vm777, %v867, %v871
  %v885 = vsel %vm778, %v867, %v871
  %v886 = vsel %vm779, %v867, %v871
  %v887 = vsel %vm780, %v867, %v871
  %v888 = vsel %vm781, %v867, %v871
  %v889 = vsel %vm782, %v867, %v871
  %v890 = vsel %vm783, %v867, %v871
  %v891 = vsel %vm784, %v867, %v871
  %v892 = vsel %vm785, %v867, %v871
  %v893 = vsel %vm786, %v867, %v871
  %v894 = vsel %vm787, %v867, %v871
  %v895 = vsel %vm788, %v867, %v871
  %v896 = vld [vmem:[%s2 + $0x50] sm:$0xff]
  %v897 = vld [vmem:[%s2 + $0x58] sm:$0xff]
  %v898 = vld [vmem:[%s2 + $0x60] sm:$0xff]
  %v899 = vld [vmem:[%s2 + $0x68] sm:$0xff]
  %v900 = vld [vmem:[%s2 + $0x70] sm:$0xff]
  %v901 = vld [vmem:[%s2 + $0x78] sm:$0xff]
  %v902 = vld [vmem:[%s2 + $0x80] sm:$0xff]
  %v903 = vld [vmem:[%s2 + $0x88] sm:$0xff]
  %v905 = vsel %vm396, %v838, 0
  %v908 = vsel %vm396, %v839, 0
  %v911 = vsel %vm396, %v840, 0
  %v914 = vsel %vm396, %v841, 0
  %v917 = vsel %vm396, %v842, 0
  %v920 = vsel %vm396, %v843, 0
  %v923 = vsel %vm396, %v844, 0
  %v926 = vsel %vm396, %v845, 0
  %v929 = vsel %vm396, %v846, 0
  %v932 = vsel %vm396, %v847, 0
  %v935 = vsel %vm396, %v848, 0
  %v938 = vsel %vm396, %v849, 0
  %v941 = vsel %vm396, %v850, 0
  %v944 = vsel %vm396, %v851, 0
  %v947 = vsel %vm396, %v852, 0
  %v950 = vsel %vm396, %v853, 0
  %v953 = vsel %vm396, %v854, 0
  %v956 = vsel %vm396, %v855, 0
  %v959 = vsel %vm396, %v856, 0
  %v962 = vsel %vm396, %v857, 0
  %v965 = vsel %vm396, %v858, 0
  %v968 = vsel %vm396, %v859, 0
  %v971 = vsel %vm396, %v860, 0
  %v974 = vsel %vm396, %v861, 0
  %976 = vmatprep.subr.mxu0 0.0
  %977 = vmatpush1.msra.mxu0 0.0
  %978 = vmatprep.subr.mxu0 0.0
  %979 = vmatpush1.msra.mxu0 0.0
  %980 = vmatprep.subr.mxu0 0.0
  %981 = vmatpush1.msra.mxu0 0.0
  %982 = vmatprep.subr.mxu0 0.0
  %983 = vmatpush1.msra.mxu0 0.0
  %984 = vmatprep.subr.mxu0 0.0
  %985 = vmatpush1.msra.mxu0 0.0
  %986 = vmatprep.subr.mxu0 0.0
  %987 = vmatpush1.msra.mxu0 0.0
  %988 = vmatprep.subr.mxu0 0.0
  %989 = vmatpush1.msra.mxu0 0.0
  %990 = vmatprep.subr.mxu0 0.0
  %991 = vmatpush1.msra.mxu0 0.0
  %992 = vmatprep.subr.mxu0 0.0
  %993 = vmatpush1.msra.mxu0 %v903
  %994 = vmatprep.subr.mxu0 0.0
  %995 = vmatpush1.msra.mxu0 %v902
  %996 = vmatprep.subr.mxu0 0.0
  %997 = vmatpush1.msra.mxu0 %v901
  %998 = vmatprep.subr.mxu0 0.0
  %999 = vmatpush1.msra.mxu0 %v900
  %1000 = vmatprep.subr.mxu0 0.0
  %1001 = vmatpush1.msra.mxu0 %v899
  %1002 = vmatprep.subr.mxu0 0.0
  %1003 = vmatpush1.msra.mxu0 %v898
  %1004 = vmatprep.subr.mxu0 0.0
  %1005 = vmatpush1.msra.mxu0 %v897
  %1006 = vmatprep.subr.mxu0 0.0
  %1007 = vmatpush1.msra.mxu0 %v896
  %1008 = vmatprep.subr.mxu0 0.0
  %1009 = vmatpush2.msra.mxu0 0.0
  %1010 = vmatprep.subr.mxu0 0.0
  %1011 = vmatpush2.msra.mxu0 0.0
  %1012 = vmatprep.subr.mxu0 0.0
  %1013 = vmatpush2.msra.mxu0 0.0
  %1014 = vmatprep.subr.mxu0 0.0
  %1015 = vmatpush2.msra.mxu0 0.0
  %1016 = vmatprep.subr.mxu0 0.0
  %1017 = vmatpush2.msra.mxu0 0.0
  %1018 = vmatprep.subr.mxu0 0.0
  %1019 = vmatpush2.msra.mxu0 0.0
  %1020 = vmatprep.subr.mxu0 0.0
  %1021 = vmatpush2.msra.mxu0 0.0
  %1022 = vmatprep.subr.mxu0 0.0
  %1023 = vmatpush2.msra.mxu0 0.0
  %1024 = vmatprep.subr.mxu0 0.0
  %1025 = vmatpush2.msra.mxu0 0.0
  %1026 = vmatprep.subr.mxu0 0.0
  %1027 = vmatpush2.msra.mxu0 0.0
  %1028 = vmatprep.subr.mxu0 0.0
  %1029 = vmatpush2.msra.mxu0 0.0
  %1030 = vmatprep.subr.mxu0 0.0
  %1031 = vmatpush2.msra.mxu0 0.0
  %1032 = vmatprep.subr.mxu0 0.0
  %1033 = vmatpush2.msra.mxu0 0.0
  %1034 = vmatprep.subr.mxu0 0.0
  %1035 = vmatpush2.msra.mxu0 0.0
  %1036 = vmatprep.subr.mxu0 0.0
  %1037 = vmatpush2.msra.mxu0 0.0
  %1038 = vmatprep.subr.mxu0 0.0
  %1039 = vmatpush2.msra.mxu0 0.0
  %1040 = vmatprep.mubr.f32.mxu0 0.0
  %1041 = vmatmul.mubr.f32.gmra.mxu0 %v905
  %v1042 = vpop.f32.mrf.mxu0
  %v1043 = vadd.f32 %v872, %v1042
  %v1044 = vpop.f32.mrf.mxu0
  %1045 = vmatprep.mubr.f32.mxu0 0.0
  %1046 = vmatmul.mubr.f32.gmra.mxu0 %v908
  %v1047 = vpop.f32.mrf.mxu0
  %v1048 = vadd.f32 %v873, %v1047
  %v1049 = vpop.f32.mrf.mxu0
  %1050 = vmatprep.mubr.f32.mxu0 0.0
  %1051 = vmatmul.mubr.f32.gmra.mxu0 %v911
  %v1052 = vpop.f32.mrf.mxu0
  %v1053 = vadd.f32 %v874, %v1052
  %v1054 = vpop.f32.mrf.mxu0
  %1055 = vmatprep.mubr.f32.mxu0 0.0
  %1056 = vmatmul.mubr.f32.gmra.mxu0 %v914
  %v1057 = vpop.f32.mrf.mxu0
  %v1058 = vadd.f32 %v875, %v1057
  %v1059 = vpop.f32.mrf.mxu0
  %1060 = vmatprep.mubr.f32.mxu0 0.0
  %1061 = vmatmul.mubr.f32.gmra.mxu0 %v917
  %v1062 = vpop.f32.mrf.mxu0
  %v1063 = vadd.f32 %v876, %v1062
  %v1064 = vpop.f32.mrf.mxu0
  %1065 = vmatprep.mubr.f32.mxu0 0.0
  %1066 = vmatmul.mubr.f32.gmra.mxu0 %v920
  %v1067 = vpop.f32.mrf.mxu0
  %v1068 = vadd.f32 %v877, %v1067
  %v1069 = vpop.f32.mrf.mxu0
  %1070 = vmatprep.mubr.f32.mxu0 0.0
  %1071 = vmatmul.mubr.f32.gmra.mxu0 %v923
  %v1072 = vpop.f32.mrf.mxu0
  %v1073 = vadd.f32 %v878, %v1072
  %v1074 = vpop.f32.mrf.mxu0
  %1075 = vmatprep.mubr.f32.mxu0 0.0
  %1076 = vmatmul.mubr.f32.gmra.mxu0 %v926
  %v1077 = vpop.f32.mrf.mxu0
  %v1078 = vadd.f32 %v879, %v1077
  %v1079 = vpop.f32.mrf.mxu0
  %1080 = vmatprep.mubr.f32.mxu0 0.0
  %1081 = vmatmul.mubr.f32.gmra.mxu0 %v929
  %v1082 = vpop.f32.mrf.mxu0
  %v1083 = vadd.f32 %v880, %v1082
  %v1084 = vpop.f32.mrf.mxu0
  %1085 = vmatprep.mubr.f32.mxu0 0.0
  %1086 = vmatmul.mubr.f32.gmra.mxu0 %v932
  %v1087 = vpop.f32.mrf.mxu0
  %v1088 = vadd.f32 %v881, %v1087
  %v1089 = vpop.f32.mrf.mxu0
  %1090 = vmatprep.mubr.f32.mxu0 0.0
  %1091 = vmatmul.mubr.f32.gmra.mxu0 %v935
  %v1092 = vpop.f32.mrf.mxu0
  %v1093 = vadd.f32 %v882, %v1092
  %v1094 = vpop.f32.mrf.mxu0
  %1095 = vmatprep.mubr.f32.mxu0 0.0
  %1096 = vmatmul.mubr.f32.gmra.mxu0 %v938
  %v1097 = vpop.f32.mrf.mxu0
  %v1098 = vadd.f32 %v883, %v1097
  %v1099 = vpop.f32.mrf.mxu0
  %1100 = vmatprep.mubr.f32.mxu0 0.0
  %1101 = vmatmul.mubr.f32.gmra.mxu0 %v941
  %v1102 = vpop.f32.mrf.mxu0
  %v1103 = vadd.f32 %v884, %v1102
  %v1104 = vpop.f32.mrf.mxu0
  %1105 = vmatprep.mubr.f32.mxu0 0.0
  %1106 = vmatmul.mubr.f32.gmra.mxu0 %v944
  %v1107 = vpop.f32.mrf.mxu0
  %v1108 = vadd.f32 %v885, %v1107
  %v1109 = vpop.f32.mrf.mxu0
  %1110 = vmatprep.mubr.f32.mxu0 0.0
  %1111 = vmatmul.mubr.f32.gmra.mxu0 %v947
  %v1112 = vpop.f32.mrf.mxu0
  %v1113 = vadd.f32 %v886, %v1112
  %v1114 = vpop.f32.mrf.mxu0
  %1115 = vmatprep.mubr.f32.mxu0 0.0
  %1116 = vmatmul.mubr.f32.gmra.mxu0 %v950
  %v1117 = vpop.f32.mrf.mxu0
  %v1118 = vadd.f32 %v887, %v1117
  %v1119 = vpop.f32.mrf.mxu0
  %1120 = vmatprep.mubr.f32.mxu0 0.0
  %1121 = vmatmul.mubr.f32.gmra.mxu0 %v953
  %v1122 = vpop.f32.mrf.mxu0
  %v1123 = vadd.f32 %v888, %v1122
  %v1124 = vpop.f32.mrf.mxu0
  %1125 = vmatprep.mubr.f32.mxu0 0.0
  %1126 = vmatmul.mubr.f32.gmra.mxu0 %v956
  %v1127 = vpop.f32.mrf.mxu0
  %v1128 = vadd.f32 %v889, %v1127
  %v1129 = vpop.f32.mrf.mxu0
  %1130 = vmatprep.mubr.f32.mxu0 0.0
  %1131 = vmatmul.mubr.f32.gmra.mxu0 %v959
  %v1132 = vpop.f32.mrf.mxu0
  %v1133 = vadd.f32 %v890, %v1132
  %v1134 = vpop.f32.mrf.mxu0
  %1135 = vmatprep.mubr.f32.mxu0 0.0
  %1136 = vmatmul.mubr.f32.gmra.mxu0 %v962
  %v1137 = vpop.f32.mrf.mxu0
  %v1138 = vadd.f32 %v891, %v1137
  %v1139 = vpop.f32.mrf.mxu0
  %1140 = vmatprep.mubr.f32.mxu0 0.0
  %1141 = vmatmul.mubr.f32.gmra.mxu0 %v965
  %v1142 = vpop.f32.mrf.mxu0
  %v1143 = vadd.f32 %v892, %v1142
  %v1144 = vpop.f32.mrf.mxu0
  %1145 = vmatprep.mubr.f32.mxu0 0.0
  %1146 = vmatmul.mubr.f32.gmra.mxu0 %v968
  %v1147 = vpop.f32.mrf.mxu0
  %v1148 = vadd.f32 %v893, %v1147
  %v1149 = vpop.f32.mrf.mxu0
  %1150 = vmatprep.mubr.f32.mxu0 0.0
  %1151 = vmatmul.mubr.f32.gmra.mxu0 %v971
  %v1152 = vpop.f32.mrf.mxu0
  %v1153 = vadd.f32 %v894, %v1152
  %v1154 = vpop.f32.mrf.mxu0
  %1155 = vmatprep.mubr.f32.mxu0 0.0
  %1156 = vmatmul.mubr.f32.gmra.mxu0 %v974
  %v1157 = vpop.f32.mrf.mxu0
  %v1158 = vadd.f32 %v895, %v1157
  %v1159 = vpop.f32.mrf.mxu0
  %1160 = vdwg.mxu0
  %v1161 = vld [vmem:[%s3 + $0x4] sm:$0x1]
  %v1162 = vld [vmem:[%s3 + $0x5] sm:$0x1]
  %v1163 = vlaneseq
  %v1164 = vshrl.u32 %v1163, 7
  %v1165 = vsub.s32 0, %v1164
  %v1166 = vrot.slane %v1161, %v1165
  %v1167 = vlaneseq
  %v1168 = vshrl.u32 %v1167, 7
  %v1169 = vsub.s32 0, %v1168
  %v1170 = vrot.slane %v1162, %v1169
  %v1171 = vsel %vm765, %v1166, %v1170
  %v1172 = vsel %vm766, %v1166, %v1170
  %v1173 = vsel %vm767, %v1166, %v1170
  %v1174 = vsel %vm768, %v1166, %v1170
  %v1175 = vsel %vm769, %v1166, %v1170
  %v1176 = vsel %vm770, %v1166, %v1170
  %v1177 = vsel %vm771, %v1166, %v1170
  %v1178 = vsel %vm772, %v1166, %v1170
  %v1179 = vsel %vm773, %v1166, %v1170
  %v1180 = vsel %vm774, %v1166, %v1170
  %v1181 = vsel %vm775, %v1166, %v1170
  %v1182 = vsel %vm776, %v1166, %v1170
  %v1183 = vsel %vm777, %v1166, %v1170
  %v1184 = vsel %vm778, %v1166, %v1170
  %v1185 = vsel %vm779, %v1166, %v1170
  %v1186 = vsel %vm780, %v1166, %v1170
  %v1187 = vsel %vm781, %v1166, %v1170
  %v1188 = vsel %vm782, %v1166, %v1170
  %v1189 = vsel %vm783, %v1166, %v1170
  %v1190 = vsel %vm784, %v1166, %v1170
  %v1191 = vsel %vm785, %v1166, %v1170
  %v1192 = vsel %vm786, %v1166, %v1170
  %v1193 = vsel %vm787, %v1166, %v1170
  %v1194 = vsel %vm788, %v1166, %v1170
  %v1195 = vld [vmem:[%s3 + $0x6] sm:$0x1]
  %v1196 = vld [vmem:[%s3 + $0x7] sm:$0x1]
  %v1197 = vlaneseq
  %v1198 = vshrl.u32 %v1197, 7
  %v1199 = vsub.s32 0, %v1198
  %v1200 = vrot.slane %v1195, %v1199
  %v1201 = vlaneseq
  %v1202 = vshrl.u32 %v1201, 7
  %v1203 = vsub.s32 0, %v1202
  %v1204 = vrot.slane %v1196, %v1203
  %v1205 = vsel %vm765, %v1200, %v1204
  %v1206 = vsel %vm766, %v1200, %v1204
  %v1207 = vsel %vm767, %v1200, %v1204
  %v1208 = vsel %vm768, %v1200, %v1204
  %v1209 = vsel %vm769, %v1200, %v1204
  %v1210 = vsel %vm770, %v1200, %v1204
  %v1211 = vsel %vm771, %v1200, %v1204
  %v1212 = vsel %vm772, %v1200, %v1204
  %v1213 = vsel %vm773, %v1200, %v1204
  %v1214 = vsel %vm774, %v1200, %v1204
  %v1215 = vsel %vm775, %v1200, %v1204
  %v1216 = vsel %vm776, %v1200, %v1204
  %v1217 = vsel %vm777, %v1200, %v1204
  %v1218 = vsel %vm778, %v1200, %v1204
  %v1219 = vsel %vm779, %v1200, %v1204
  %v1220 = vsel %vm780, %v1200, %v1204
  %v1221 = vsel %vm781, %v1200, %v1204
  %v1222 = vsel %vm782, %v1200, %v1204
  %v1223 = vsel %vm783, %v1200, %v1204
  %v1224 = vsel %vm784, %v1200, %v1204
  %v1225 = vsel %vm785, %v1200, %v1204
  %v1226 = vsel %vm786, %v1200, %v1204
  %v1227 = vsel %vm787, %v1200, %v1204
  %v1228 = vsel %vm788, %v1200, %v1204
  %vm1229 = vcmask 261120
  %v1230 = vsel %vm1229, %v1043, 0.0
  %1231 = vadd.xlane.f32.xlu0 %v1230
  %v1232 = vpop.xlane.xlu0 %1231
  %v1233 = vsel %vm1229, %v1048, 0.0
  %1234 = vadd.xlane.f32.xlu0 %v1233
  %v1235 = vpop.xlane.xlu0 %1234
  %v1236 = vsel %vm1229, %v1053, 0.0
  %1237 = vadd.xlane.f32.xlu0 %v1236
  %v1238 = vpop.xlane.xlu0 %1237
  %v1239 = vsel %vm1229, %v1058, 0.0
  %1240 = vadd.xlane.f32.xlu0 %v1239
  %v1241 = vpop.xlane.xlu0 %1240
  %v1242 = vsel %vm1229, %v1063, 0.0
  %1243 = vadd.xlane.f32.xlu0 %v1242
  %v1244 = vpop.xlane.xlu0 %1243
  %v1245 = vsel %vm1229, %v1068, 0.0
  %1246 = vadd.xlane.f32.xlu0 %v1245
  %v1247 = vpop.xlane.xlu0 %1246
  %v1248 = vsel %vm1229, %v1073, 0.0
  %1249 = vadd.xlane.f32.xlu0 %v1248
  %v1250 = vpop.xlane.xlu0 %1249
  %v1251 = vsel %vm1229, %v1078, 0.0
  %1252 = vadd.xlane.f32.xlu0 %v1251
  %v1253 = vpop.xlane.xlu0 %1252
  %v1254 = vsel %vm1229, %v1083, 0.0
  %1255 = vadd.xlane.f32.xlu0 %v1254
  %v1256 = vpop.xlane.xlu0 %1255
  %v1257 = vsel %vm1229, %v1088, 0.0
  %1258 = vadd.xlane.f32.xlu0 %v1257
  %v1259 = vpop.xlane.xlu0 %1258
  %v1260 = vsel %vm1229, %v1093, 0.0
  %1261 = vadd.xlane.f32.xlu0 %v1260
  %v1262 = vpop.xlane.xlu0 %1261
  %v1263 = vsel %vm1229, %v1098, 0.0
  %1264 = vadd.xlane.f32.xlu0 %v1263
  %v1265 = vpop.xlane.xlu0 %1264
  %v1266 = vsel %vm1229, %v1103, 0.0
  %1267 = vadd.xlane.f32.xlu0 %v1266
  %v1268 = vpop.xlane.xlu0 %1267
  %v1269 = vsel %vm1229, %v1108, 0.0
  %1270 = vadd.xlane.f32.xlu0 %v1269
  %v1271 = vpop.xlane.xlu0 %1270
  %v1272 = vsel %vm1229, %v1113, 0.0
  %1273 = vadd.xlane.f32.xlu0 %v1272
  %v1274 = vpop.xlane.xlu0 %1273
  %v1275 = vsel %vm1229, %v1118, 0.0
  %1276 = vadd.xlane.f32.xlu0 %v1275
  %v1277 = vpop.xlane.xlu0 %1276
  %v1278 = vsel %vm1229, %v1123, 0.0
  %1279 = vadd.xlane.f32.xlu0 %v1278
  %v1280 = vpop.xlane.xlu0 %1279
  %v1281 = vsel %vm1229, %v1128, 0.0
  %1282 = vadd.xlane.f32.xlu0 %v1281
  %v1283 = vpop.xlane.xlu0 %1282
  %v1284 = vsel %vm1229, %v1133, 0.0
  %1285 = vadd.xlane.f32.xlu0 %v1284
  %v1286 = vpop.xlane.xlu0 %1285
  %v1287 = vsel %vm1229, %v1138, 0.0
  %1288 = vadd.xlane.f32.xlu0 %v1287
  %v1289 = vpop.xlane.xlu0 %1288
  %v1290 = vsel %vm1229, %v1143, 0.0
  %1291 = vadd.xlane.f32.xlu0 %v1290
  %v1292 = vpop.xlane.xlu0 %1291
  %v1293 = vsel %vm1229, %v1148, 0.0
  %1294 = vadd.xlane.f32.xlu0 %v1293
  %v1295 = vpop.xlane.xlu0 %1294
  %v1296 = vsel %vm1229, %v1153, 0.0
  %1297 = vadd.xlane.f32.xlu0 %v1296
  %v1298 = vpop.xlane.xlu0 %1297
  %v1299 = vsel %vm1229, %v1158, 0.0
  %1300 = vadd.xlane.f32.xlu0 %v1299
  %v1301 = vpop.xlane.xlu0 %1300
  %v1302 = vrcp.pop 32.0
  %v1303 = vmul.f32 %v1232, %v1302
  %v1304 = vmul.f32 %v1235, %v1302
  %v1305 = vmul.f32 %v1238, %v1302
  %v1306 = vmul.f32 %v1241, %v1302
  %v1307 = vmul.f32 %v1244, %v1302
  %v1308 = vmul.f32 %v1247, %v1302
  %v1309 = vmul.f32 %v1250, %v1302
  %v1310 = vmul.f32 %v1253, %v1302
  %v1311 = vmul.f32 %v1256, %v1302
  %v1312 = vmul.f32 %v1259, %v1302
  %v1313 = vmul.f32 %v1262, %v1302
  %v1314 = vmul.f32 %v1265, %v1302
  %v1315 = vmul.f32 %v1268, %v1302
  %v1316 = vmul.f32 %v1271, %v1302
  %v1317 = vmul.f32 %v1274, %v1302
  %v1318 = vmul.f32 %v1277, %v1302
  %v1319 = vmul.f32 %v1280, %v1302
  %v1320 = vmul.f32 %v1283, %v1302
  %v1321 = vmul.f32 %v1286, %v1302
  %v1322 = vmul.f32 %v1289, %v1302
  %v1323 = vmul.f32 %v1292, %v1302
  %v1324 = vmul.f32 %v1295, %v1302
  %v1325 = vmul.f32 %v1298, %v1302
  %v1326 = vmul.f32 %v1301, %v1302
  %v1327 = vsub.f32 %v1043, %v1303
  %v1328 = vsub.f32 %v1048, %v1304
  %v1329 = vsub.f32 %v1053, %v1305
  %v1330 = vsub.f32 %v1058, %v1306
  %v1331 = vsub.f32 %v1063, %v1307
  %v1332 = vsub.f32 %v1068, %v1308
  %v1333 = vsub.f32 %v1073, %v1309
  %v1334 = vsub.f32 %v1078, %v1310
  %v1335 = vsub.f32 %v1083, %v1311
  %v1336 = vsub.f32 %v1088, %v1312
  %v1337 = vsub.f32 %v1093, %v1313
  %v1338 = vsub.f32 %v1098, %v1314
  %v1339 = vsub.f32 %v1103, %v1315
  %v1340 = vsub.f32 %v1108, %v1316
  %v1341 = vsub.f32 %v1113, %v1317
  %v1342 = vsub.f32 %v1118, %v1318
  %v1343 = vsub.f32 %v1123, %v1319
  %v1344 = vsub.f32 %v1128, %v1320
  %v1345 = vsub.f32 %v1133, %v1321
  %v1346 = vsub.f32 %v1138, %v1322
  %v1347 = vsub.f32 %v1143, %v1323
  %v1348 = vsub.f32 %v1148, %v1324
  %v1349 = vsub.f32 %v1153, %v1325
  %v1350 = vsub.f32 %v1158, %v1326
  %v1351 = vmul.f32 %v1327, %v1327
  %v1352 = vmul.f32 %v1328, %v1328
  %v1353 = vmul.f32 %v1329, %v1329
  %v1354 = vmul.f32 %v1330, %v1330
  %v1355 = vmul.f32 %v1331, %v1331
  %v1356 = vmul.f32 %v1332, %v1332
  %v1357 = vmul.f32 %v1333, %v1333
  %v1358 = vmul.f32 %v1334, %v1334
  %v1359 = vmul.f32 %v1335, %v1335
  %v1360 = vmul.f32 %v1336, %v1336
  %v1361 = vmul.f32 %v1337, %v1337
  %v1362 = vmul.f32 %v1338, %v1338
  %v1363 = vmul.f32 %v1339, %v1339
  %v1364 = vmul.f32 %v1340, %v1340
  %v1365 = vmul.f32 %v1341, %v1341
  %v1366 = vmul.f32 %v1342, %v1342
  %v1367 = vmul.f32 %v1343, %v1343
  %v1368 = vmul.f32 %v1344, %v1344
  %v1369 = vmul.f32 %v1345, %v1345
  %v1370 = vmul.f32 %v1346, %v1346
  %v1371 = vmul.f32 %v1347, %v1347
  %v1372 = vmul.f32 %v1348, %v1348
  %v1373 = vmul.f32 %v1349, %v1349
  %v1374 = vmul.f32 %v1350, %v1350
  %v1375 = vsel %vm1229, %v1351, 0.0
  %1376 = vadd.xlane.f32.xlu0 %v1375
  %v1377 = vpop.xlane.xlu0 %1376
  %v1378 = vsel %vm1229, %v1352, 0.0
  %1379 = vadd.xlane.f32.xlu0 %v1378
  %v1380 = vpop.xlane.xlu0 %1379
  %v1381 = vsel %vm1229, %v1353, 0.0
  %1382 = vadd.xlane.f32.xlu0 %v1381
  %v1383 = vpop.xlane.xlu0 %1382
  %v1384 = vsel %vm1229, %v1354, 0.0
  %1385 = vadd.xlane.f32.xlu0 %v1384
  %v1386 = vpop.xlane.xlu0 %1385
  %v1387 = vsel %vm1229, %v1355, 0.0
  %1388 = vadd.xlane.f32.xlu0 %v1387
  %v1389 = vpop.xlane.xlu0 %1388
  %v1390 = vsel %vm1229, %v1356, 0.0
  %1391 = vadd.xlane.f32.xlu0 %v1390
  %v1392 = vpop.xlane.xlu0 %1391
  %v1393 = vsel %vm1229, %v1357, 0.0
  %1394 = vadd.xlane.f32.xlu0 %v1393
  %v1395 = vpop.xlane.xlu0 %1394
  %v1396 = vsel %vm1229, %v1358, 0.0
  %1397 = vadd.xlane.f32.xlu0 %v1396
  %v1398 = vpop.xlane.xlu0 %1397
  %v1399 = vsel %vm1229, %v1359, 0.0
  %1400 = vadd.xlane.f32.xlu0 %v1399
  %v1401 = vpop.xlane.xlu0 %1400
  %v1402 = vsel %vm1229, %v1360, 0.0
  %1403 = vadd.xlane.f32.xlu0 %v1402
  %v1404 = vpop.xlane.xlu0 %1403
  %v1405 = vsel %vm1229, %v1361, 0.0
  %1406 = vadd.xlane.f32.xlu0 %v1405
  %v1407 = vpop.xlane.xlu0 %1406
  %v1408 = vsel %vm1229, %v1362, 0.0
  %1409 = vadd.xlane.f32.xlu0 %v1408
  %v1410 = vpop.xlane.xlu0 %1409
  %v1411 = vsel %vm1229, %v1363, 0.0
  %1412 = vadd.xlane.f32.xlu0 %v1411
  %v1413 = vpop.xlane.xlu0 %1412
  %v1414 = vsel %vm1229, %v1364, 0.0
  %1415 = vadd.xlane.f32.xlu0 %v1414
  %v1416 = vpop.xlane.xlu0 %1415
  %v1417 = vsel %vm1229, %v1365, 0.0
  %1418 = vadd.xlane.f32.xlu0 %v1417
  %v1419 = vpop.xlane.xlu0 %1418
  %v1420 = vsel %vm1229, %v1366, 0.0
  %1421 = vadd.xlane.f32.xlu0 %v1420
  %v1422 = vpop.xlane.xlu0 %1421
  %v1423 = vsel %vm1229, %v1367, 0.0
  %1424 = vadd.xlane.f32.xlu0 %v1423
  %v1425 = vpop.xlane.xlu0 %1424
  %v1426 = vsel %vm1229, %v1368, 0.0
  %1427 = vadd.xlane.f32.xlu0 %v1426
  %v1428 = vpop.xlane.xlu0 %1427
  %v1429 = vsel %vm1229, %v1369, 0.0
  %1430 = vadd.xlane.f32.xlu0 %v1429
  %v1431 = vpop.xlane.xlu0 %1430
  %v1432 = vsel %vm1229, %v1370, 0.0
  %1433 = vadd.xlane.f32.xlu0 %v1432
  %v1434 = vpop.xlane.xlu0 %1433
  %v1435 = vsel %vm1229, %v1371, 0.0
  %1436 = vadd.xlane.f32.xlu0 %v1435
  %v1437 = vpop.xlane.xlu0 %1436
  %v1438 = vsel %vm1229, %v1372, 0.0
  %1439 = vadd.xlane.f32.xlu0 %v1438
  %v1440 = vpop.xlane.xlu0 %1439
  %v1441 = vsel %vm1229, %v1373, 0.0
  %1442 = vadd.xlane.f32.xlu0 %v1441
  %v1443 = vpop.xlane.xlu0 %1442
  %v1444 = vsel %vm1229, %v1374, 0.0
  %1445 = vadd.xlane.f32.xlu0 %v1444
  %v1446 = vpop.xlane.xlu0 %1445
  %v1447 = vmul.f32 %v1377, %v1302
  %v1448 = vmul.f32 %v1380, %v1302
  %v1449 = vmul.f32 %v1383, %v1302
  %v1450 = vmul.f32 %v1386, %v1302
  %v1451 = vmul.f32 %v1389, %v1302
  %v1452 = vmul.f32 %v1392, %v1302
  %v1453 = vmul.f32 %v1395, %v1302
  %v1454 = vmul.f32 %v1398, %v1302
  %v1455 = vmul.f32 %v1401, %v1302
  %v1456 = vmul.f32 %v1404, %v1302
  %v1457 = vmul.f32 %v1407, %v1302
  %v1458 = vmul.f32 %v1410, %v1302
  %v1459 = vmul.f32 %v1413, %v1302
  %v1460 = vmul.f32 %v1416, %v1302
  %v1461 = vmul.f32 %v1419, %v1302
  %v1462 = vmul.f32 %v1422, %v1302
  %v1463 = vmul.f32 %v1425, %v1302
  %v1464 = vmul.f32 %v1428, %v1302
  %v1465 = vmul.f32 %v1431, %v1302
  %v1466 = vmul.f32 %v1434, %v1302
  %v1467 = vmul.f32 %v1437, %v1302
  %v1468 = vmul.f32 %v1440, %v1302
  %v1469 = vmul.f32 %v1443, %v1302
  %v1470 = vmul.f32 %v1446, %v1302
  %v1471 = vadd.f32 %v1447, 1e-05
  %v1472 = vadd.f32 %v1448, 1e-05
  %v1473 = vadd.f32 %v1449, 1e-05
  %v1474 = vadd.f32 %v1450, 1e-05
  %v1475 = vadd.f32 %v1451, 1e-05
  %v1476 = vadd.f32 %v1452, 1e-05
  %v1477 = vadd.f32 %v1453, 1e-05
  %v1478 = vadd.f32 %v1454, 1e-05
  %v1479 = vadd.f32 %v1455, 1e-05
  %v1480 = vadd.f32 %v1456, 1e-05
  %v1481 = vadd.f32 %v1457, 1e-05
  %v1482 = vadd.f32 %v1458, 1e-05
  %v1483 = vadd.f32 %v1459, 1e-05
  %v1484 = vadd.f32 %v1460, 1e-05
  %v1485 = vadd.f32 %v1461, 1e-05
  %v1486 = vadd.f32 %v1462, 1e-05
  %v1487 = vadd.f32 %v1463, 1e-05
  %v1488 = vadd.f32 %v1464, 1e-05
  %v1489 = vadd.f32 %v1465, 1e-05
  %v1490 = vadd.f32 %v1466, 1e-05
  %v1491 = vadd.f32 %v1467, 1e-05
  %v1492 = vadd.f32 %v1468, 1e-05
  %v1493 = vadd.f32 %v1469, 1e-05
  %v1494 = vadd.f32 %v1470, 1e-05
  %v1495 = vrsqrt.pop %v1471
  %v1496 = vrsqrt.pop %v1472
  %v1497 = vrsqrt.pop %v1473
  %v1498 = vrsqrt.pop %v1474
  %v1499 = vrsqrt.pop %v1475
  %v1500 = vrsqrt.pop %v1476
  %v1501 = vrsqrt.pop %v1477
  %v1502 = vrsqrt.pop %v1478
  %v1503 = vrsqrt.pop %v1479
  %v1504 = vrsqrt.pop %v1480
  %v1505 = vrsqrt.pop %v1481
  %v1506 = vrsqrt.pop %v1482
  %v1507 = vrsqrt.pop %v1483
  %v1508 = vrsqrt.pop %v1484
  %v1509 = vrsqrt.pop %v1485
  %v1510 = vrsqrt.pop %v1486
  %v1511 = vrsqrt.pop %v1487
  %v1512 = vrsqrt.pop %v1488
  %v1513 = vrsqrt.pop %v1489
  %v1514 = vrsqrt.pop %v1490
  %v1515 = vrsqrt.pop %v1491
  %v1516 = vrsqrt.pop %v1492
  %v1517 = vrsqrt.pop %v1493
  %v1518 = vrsqrt.pop %v1494
  %v1519 = vmul.f32 %v1171, %v1495
  %v1520 = vmul.f32 %v1172, %v1496
  %v1521 = vmul.f32 %v1173, %v1497
  %v1522 = vmul.f32 %v1174, %v1498
  %v1523 = vmul.f32 %v1175, %v1499
  %v1524 = vmul.f32 %v1176, %v1500
  %v1525 = vmul.f32 %v1177, %v1501
  %v1526 = vmul.f32 %v1178, %v1502
  %v1527 = vmul.f32 %v1179, %v1503
  %v1528 = vmul.f32 %v1180, %v1504
  %v1529 = vmul.f32 %v1181, %v1505
  %v1530 = vmul.f32 %v1182, %v1506
  %v1531 = vmul.f32 %v1183, %v1507
  %v1532 = vmul.f32 %v1184, %v1508
  %v1533 = vmul.f32 %v1185, %v1509
  %v1534 = vmul.f32 %v1186, %v1510
  %v1535 = vmul.f32 %v1187, %v1511
  %v1536 = vmul.f32 %v1188, %v1512
  %v1537 = vmul.f32 %v1189, %v1513
  %v1538 = vmul.f32 %v1190, %v1514
  %v1539 = vmul.f32 %v1191, %v1515
  %v1540 = vmul.f32 %v1192, %v1516
  %v1541 = vmul.f32 %v1193, %v1517
  %v1542 = vmul.f32 %v1194, %v1518
  %v1543 = vmul.f32 %v1043, %v1519
  %v1544 = vmul.f32 %v1048, %v1520
  %v1545 = vmul.f32 %v1053, %v1521
  %v1546 = vmul.f32 %v1058, %v1522
  %v1547 = vmul.f32 %v1063, %v1523
  %v1548 = vmul.f32 %v1068, %v1524
  %v1549 = vmul.f32 %v1073, %v1525
  %v1550 = vmul.f32 %v1078, %v1526
  %v1551 = vmul.f32 %v1083, %v1527
  %v1552 = vmul.f32 %v1088, %v1528
  %v1553 = vmul.f32 %v1093, %v1529
  %v1554 = vmul.f32 %v1098, %v1530
  %v1555 = vmul.f32 %v1103, %v1531
  %v1556 = vmul.f32 %v1108, %v1532
  %v1557 = vmul.f32 %v1113, %v1533
  %v1558 = vmul.f32 %v1118, %v1534
  %v1559 = vmul.f32 %v1123, %v1535
  %v1560 = vmul.f32 %v1128, %v1536
  %v1561 = vmul.f32 %v1133, %v1537
  %v1562 = vmul.f32 %v1138, %v1538
  %v1563 = vmul.f32 %v1143, %v1539
  %v1564 = vmul.f32 %v1148, %v1540
  %v1565 = vmul.f32 %v1153, %v1541
  %v1566 = vmul.f32 %v1158, %v1542
  %v1567 = vmul.f32 %v1303, %v1519
  %v1568 = vmul.f32 %v1304, %v1520
  %v1569 = vmul.f32 %v1305, %v1521
  %v1570 = vmul.f32 %v1306, %v1522
  %v1571 = vmul.f32 %v1307, %v1523
  %v1572 = vmul.f32 %v1308, %v1524
  %v1573 = vmul.f32 %v1309, %v1525
  %v1574 = vmul.f32 %v1310, %v1526
  %v1575 = vmul.f32 %v1311, %v1527
  %v1576 = vmul.f32 %v1312, %v1528
  %v1577 = vmul.f32 %v1313, %v1529
  %v1578 = vmul.f32 %v1314, %v1530
  %v1579 = vmul.f32 %v1315, %v1531
  %v1580 = vmul.f32 %v1316, %v1532
  %v1581 = vmul.f32 %v1317, %v1533
  %v1582 = vmul.f32 %v1318, %v1534
  %v1583 = vmul.f32 %v1319, %v1535
  %v1584 = vmul.f32 %v1320, %v1536
  %v1585 = vmul.f32 %v1321, %v1537
  %v1586 = vmul.f32 %v1322, %v1538
  %v1587 = vmul.f32 %v1323, %v1539
  %v1588 = vmul.f32 %v1324, %v1540
  %v1589 = vmul.f32 %v1325, %v1541
  %v1590 = vmul.f32 %v1326, %v1542
  %v1591 = vsub.f32 %v1205, %v1567
  %v1592 = vsub.f32 %v1206, %v1568
  %v1593 = vsub.f32 %v1207, %v1569
  %v1594 = vsub.f32 %v1208, %v1570
  %v1595 = vsub.f32 %v1209, %v1571
  %v1596 = vsub.f32 %v1210, %v1572
  %v1597 = vsub.f32 %v1211, %v1573
  %v1598 = vsub.f32 %v1212, %v1574
  %v1599 = vsub.f32 %v1213, %v1575
  %v1600 = vsub.f32 %v1214, %v1576
  %v1601 = vsub.f32 %v1215, %v1577
  %v1602 = vsub.f32 %v1216, %v1578
  %v1603 = vsub.f32 %v1217, %v1579
  %v1604 = vsub.f32 %v1218, %v1580
  %v1605 = vsub.f32 %v1219, %v1581
  %v1606 = vsub.f32 %v1220, %v1582
  %v1607 = vsub.f32 %v1221, %v1583
  %v1608 = vsub.f32 %v1222, %v1584
  %v1609 = vsub.f32 %v1223, %v1585
  %v1610 = vsub.f32 %v1224, %v1586
  %v1611 = vsub.f32 %v1225, %v1587
  %v1612 = vsub.f32 %v1226, %v1588
  %v1613 = vsub.f32 %v1227, %v1589
  %v1614 = vsub.f32 %v1228, %v1590
  %v1615 = vadd.f32 %v1543, %v1591
  %v1616 = vadd.f32 %v1544, %v1592
  %v1617 = vadd.f32 %v1545, %v1593
  %v1618 = vadd.f32 %v1546, %v1594
  %v1619 = vadd.f32 %v1547, %v1595
  %v1620 = vadd.f32 %v1548, %v1596
  %v1621 = vadd.f32 %v1549, %v1597
  %v1622 = vadd.f32 %v1550, %v1598
  %v1623 = vadd.f32 %v1551, %v1599
  %v1624 = vadd.f32 %v1552, %v1600
  %v1625 = vadd.f32 %v1553, %v1601
  %v1626 = vadd.f32 %v1554, %v1602
  %v1627 = vadd.f32 %v1555, %v1603
  %v1628 = vadd.f32 %v1556, %v1604
  %v1629 = vadd.f32 %v1557, %v1605
  %v1630 = vadd.f32 %v1558, %v1606
  %v1631 = vadd.f32 %v1559, %v1607
  %v1632 = vadd.f32 %v1560, %v1608
  %v1633 = vadd.f32 %v1561, %v1609
  %v1634 = vadd.f32 %v1562, %v1610
  %v1635 = vadd.f32 %v1563, %v1611
  %v1636 = vadd.f32 %v1564, %v1612
  %v1637 = vadd.f32 %v1565, %v1613
  %v1638 = vadd.f32 %v1566, %v1614
  %1639 = vst.msk [vmem:[%s4] sm:$0xff] %vm1229, %v1615
  %1640 = vst.msk [vmem:[%s4 + $0x8] sm:$0xff] %vm1229, %v1616
  %1641 = vst.msk [vmem:[%s4 + $0x10] sm:$0xff] %vm1229, %v1617
  %1642 = vst.msk [vmem:[%s4 + $0x18] sm:$0xff] %vm1229, %v1618
  %1643 = vst.msk [vmem:[%s4 + $0x20] sm:$0xff] %vm1229, %v1619
  %1644 = vst.msk [vmem:[%s4 + $0x28] sm:$0xff] %vm1229, %v1620
  %1645 = vst.msk [vmem:[%s4 + $0x30] sm:$0xff] %vm1229, %v1621
  %1646 = vst.msk [vmem:[%s4 + $0x38] sm:$0xff] %vm1229, %v1622
  %1647 = vst.msk [vmem:[%s4 + $0x40] sm:$0xff] %vm1229, %v1623
  %1648 = vst.msk [vmem:[%s4 + $0x48] sm:$0xff] %vm1229, %v1624
  %1649 = vst.msk [vmem:[%s4 + $0x50] sm:$0xff] %vm1229, %v1625
  %1650 = vst.msk [vmem:[%s4 + $0x58] sm:$0xff] %vm1229, %v1626
  %1651 = vst.msk [vmem:[%s4 + $0x60] sm:$0xff] %vm1229, %v1627
  %1652 = vst.msk [vmem:[%s4 + $0x68] sm:$0xff] %vm1229, %v1628
  %1653 = vst.msk [vmem:[%s4 + $0x70] sm:$0xff] %vm1229, %v1629
  %1654 = vst.msk [vmem:[%s4 + $0x78] sm:$0xff] %vm1229, %v1630
  %1655 = vst.msk [vmem:[%s4 + $0x80] sm:$0xff] %vm1229, %v1631
  %1656 = vst.msk [vmem:[%s4 + $0x88] sm:$0xff] %vm1229, %v1632
  %1657 = vst.msk [vmem:[%s4 + $0x90] sm:$0xff] %vm1229, %v1633
  %1658 = vst.msk [vmem:[%s4 + $0x98] sm:$0xff] %vm1229, %v1634
  %1659 = vst.msk [vmem:[%s4 + $0xa0] sm:$0xff] %vm1229, %v1635
  %1660 = vst.msk [vmem:[%s4 + $0xa8] sm:$0xff] %vm1229, %v1636
  %1661 = vst.msk [vmem:[%s4 + $0xb0] sm:$0xff] %vm1229, %v1637
  %1662 = vst.msk [vmem:[%s4 + $0xb8] sm:$0xff] %vm1229, %v1638
  // Predicated region
  $region18: #{encoder_forward.1} parent=0 // pred_check
    _
  $region19: #{encoder_forward.1} parent=0 // pred_check_branch
    %1664 = sbr.rel (0) target = $region21
  $region20: #{encoder_forward.1} parent=0 // pred_region
    _
  $region21: #{encoder_forward.1} parent=0 // pred_fallthru
    _
  // Predicated region
  $region22: #{encoder_forward.1} parent=0 // pred_check
    _
  $region23: #{encoder_forward.1} parent=0 // pred_check_branch
    %1666 = sbr.rel (0) target = $region25
  $region24: #{encoder_forward.1} parent=0 // pred_region
    _
  $region25: #{encoder_forward.1} parent=0 // pred_fallthru
    _

</llo_original>
